<compile_context>
chip_gen: v7x
topology: tpu7x:2x2x1
jax: 0.10.0
libtpu: 0.0.40
codegen_flags: <defaults>
</compile_context>

<pallas_src>
import functools

import jax
import jax.numpy as jnp
from jax.experimental import pallas as pl
from jax.experimental.pallas import tpu as pltpu


def _round_up(x, m):
    return ((x + m - 1) // m) * m


def _vmem_bytes(Tb, Bb, Hp, Cp, NCp, cbytes):
    """Rough VMEM footprint of one grid step (double-buffered inputs/outputs + scratch)."""
    est = 2 * Tb * Bb * Hp * cbytes                                  # x tile (dbl-buffered)
    est += Tb * Bb * Cp * cbytes                                     # shared xp/h scratch
    est += Bb * (Cp + Hp) * 4                                        # h carry + running max
    est += 2 * (Hp * Cp + Cp * Cp + Cp * Hp + Hp * NCp) * cbytes     # weights (dbl-buffered)
    est += 2 * (Cp + Hp + NCp) * 4                                   # biases
    est += 2 * Bb * (NCp + Cp) * 4                                   # outputs (dbl-buffered)
    return est


def _elman_kernel(x_ref, w1x_ref, w1h_ref, b1_ref, w2_ref, b2_ref, w3_ref, b3_ref,
                  logits_ref, hidden_ref,
                  h_scr, m_scr, ph_scr,
                  *, sub_block, recur_unroll):
    """One (batch-tile, time-tile) grid step.

    h_scr  : (Bb, Cp) f32  -- recurrent state carried across time tiles
    m_scr  : (Bb, Hp) f32  -- running max_t relu(h_t @ W2 + b2)
    ph_scr : (Tb, Bb, Cp) compute dtype -- shared buffer: holds the hoisted input
             projection x_t @ W1x, each slot overwritten with h_t once consumed
             (aliases the old f32 xp buffer with the h-history buffer).
    """
    t = pl.program_id(1)
    n_t = pl.num_programs(1)
    Tb, Bb, Hp = x_ref.shape
    Cp = w1h_ref.shape[0]
    cdt = w1h_ref.dtype          # MXU operand / scratch dtype (bf16 fast, f32 reference)
    f32 = jnp.float32
    n_sub = Tb // sub_block

    @pl.when(t == 0)
    def _init():
        h_scr[...] = jnp.zeros_like(h_scr)
        # relu >= 0, so zero-init of the running max is equivalent to -inf and safe.
        m_scr[...] = jnp.zeros_like(m_scr)

    # ---- Hoisted input projection x @ W1x (off the serial chain), chunked over time so
    # the f32 matmul result stays a small (sub_block*Bb, Cp) temporary before the cast.
    w1x = w1x_ref[...]

    @pl.loop(0, n_sub)
    def _xproj(c):
        s = pl.multiple_of(c * sub_block, sub_block)
        xc = x_ref[pl.ds(s, sub_block)]                              # (sb, Bb, Hp)
        ph_scr[pl.ds(s, sub_block)] = (
            jnp.dot(xc.reshape(sub_block * Bb, Hp), w1x,
                    preferred_element_type=f32)
            .reshape(sub_block, Bb, Cp).astype(cdt))

    # ---- Serial recurrence: per step only h @ W1h (MXU) + bias add + sigmoid.
    w1h = w1h_ref[...]   # hoisted load: once per tile, not once per step
    b1 = b1_ref[...]     # (1, Cp) f32; per-step add rides otherwise-idle VPU slots

    # TODO(synk): stage W1h in the MXU once per tile via pltpu.matmul_push_rhs /
    # matmul_acc_lhs / matmul_pop so the (Cp,Cp) weight is not re-streamed through the
    # systolic array on every serial step (v7x's MRB could also absorb the xp add).
    def step(i, h):
        mm = jnp.dot(h, w1h, preferred_element_type=f32)             # serial critical path
        pre = ph_scr[i].astype(f32) + b1 + mm
        # sigmoid in the compute dtype: bf16 EUP path on v6e/v7x (f32 on the
        # compute_dtype=float32 reference path; on v5e f32 would be preferred).
        h_new = jax.nn.sigmoid(pre.astype(cdt))
        ph_scr[i] = h_new        # overwrite the consumed xp slot with h_t for the W2 pass
        return h_new

    h_last = jax.lax.fori_loop(0, Tb, step, h_scr[...].astype(cdt),
                               unroll=min(recur_unroll, Tb))
    h_scr[...] = h_last.astype(f32)

    # ---- Deferred lin2 + relu + running max over time, chunked over sub_block steps so
    # the f32 intermediate never becomes a full (Tb, Bb, Hp) VMEM temporary.
    w2 = w2_ref[...]
    b2 = b2_ref[...]

    def w2_step(c, m):
        s = pl.multiple_of(c * sub_block, sub_block)
        hs = ph_scr[pl.ds(s, sub_block)]                             # (sb, Bb, Cp)
        out = jnp.dot(hs.reshape(sub_block * Bb, Cp), w2,
                      preferred_element_type=f32) + b2
        out = jnp.maximum(out, 0.0).reshape(sub_block, Bb, Hp)
        return jnp.maximum(m, jnp.max(out, axis=0))

    m_scr[...] = jax.lax.fori_loop(0, n_sub, w2_step, m_scr[...])

    @pl.when(t == n_t - 1)
    def _finalize():
        logits_ref[...] = (
            jnp.dot(m_scr[...].astype(w3_ref.dtype), w3_ref[...],
                    preferred_element_type=f32) + b3_ref[...])
        hidden_ref[...] = h_scr[...]


def elman_forward(tokens, params, *, compute_dtype=jnp.bfloat16,
                  batch_block=None, time_block=None, recur_unroll=8,
                  vmem_budget_bytes=40 << 20):
    """tokens: (B, T) int32 ids.  Returns (logits (B, num_cls), hidden (B, C))."""
    emb, w1x, w1h, b1, w2, b2, w3, b3 = params
    B, T = tokens.shape
    H = emb.shape[1]
    C = w1h.shape[0]
    NC = w3.shape[1]

    # Lane/sublane friendly padded sizes.
    Hp = _round_up(H, 128)
    Cp = _round_up(C, 128)
    NCp = _round_up(NC, 128)

    cdt = compute_dtype
    f32 = jnp.float32
    cbytes = jnp.finfo(cdt).bits // 8

    # --- batch tile: bigger tiles shorten the total serial h@W1h chain (n_b * T steps)
    # and Bb >= 256 fills the 256-wide MXU on v6e/v7x.  For large B keep >= 2 batch
    # tiles so the "parallel" grid axis can still shard across v7x's two TensorCores.
    if batch_block is None:
        Bp0 = _round_up(B, 8)
        if Bp0 <= 256:
            batch_block = Bp0
        else:
            bb = 512
            while bb > 256 and pl.cdiv(Bp0, bb) < 2:
                bb //= 2
            batch_block = bb
    Bb = batch_block
    Bp = _round_up(B, Bb)
    n_b = Bp // Bb

    # --- time tile: largest candidate whose VMEM footprint fits the budget
    # (budget default sized so tiles fit v7x's 64 MiB physical VMEM with headroom).
    if time_block is None:
        cands = [c for c in (256, 128, 64, 32, 16, 8) if T % c == 0]
        if T <= 256:
            cands = [T] + cands
        cands += [c for c in (4, 2, 1) if T % c == 0]
        time_block = cands[-1]
        for c in cands:
            if _vmem_bytes(c, Bb, Hp, Cp, NCp, cbytes) <= vmem_budget_bytes:
                time_block = c
                break
    Tb = time_block
    assert T % Tb == 0, "time_block must divide T"
    n_t = T // Tb

    # Sub-block for the chunked input-projection / W2 passes inside a time tile.
    sub_block = 1
    for cand in (16, 8, 4, 2, 1):
        if Tb % cand == 0:
            sub_block = cand
            break
    if Tb <= 16:
        sub_block = Tb

    # Explicit scoped-VMEM limit (defaults are only 16 MiB on v5e / 32 MiB on v6e+).
    est = _vmem_bytes(Tb, Bb, Hp, Cp, NCp, cbytes)
    vmem_limit = int(min(max(est * 5 // 4 + (2 << 20), 32 << 20), 100 << 20))

    # Zero-pad params (semantics preserving) and cast matmul operands to compute dtype.
    emb_p = jnp.pad(emb, ((0, 0), (0, Hp - H))).astype(cdt)
    w1x_p = jnp.pad(w1x, ((0, Hp - H), (0, Cp - C))).astype(cdt)
    w1h_p = jnp.pad(w1h, ((0, Cp - C), (0, Cp - C))).astype(cdt)
    b1_p = jnp.pad(b1, ((0, 0), (0, Cp - C))).astype(f32)
    w2_p = jnp.pad(w2, ((0, Cp - C), (0, Hp - H))).astype(cdt)
    b2_p = jnp.pad(b2, ((0, 0), (0, Hp - H))).astype(f32)
    w3_p = jnp.pad(w3, ((0, Hp - H), (0, NCp - NC))).astype(cdt)
    b3_p = jnp.pad(b3, ((0, 0), (0, NCp - NC))).astype(f32)

    tokens_p = jnp.pad(tokens, ((0, Bp - B), (0, 0)))
    # Embedding gather directly in time-major layout and compute dtype (halves HBM
    # traffic for x on the bf16 path).
    x = jnp.take(emb_p, tokens_p.T, axis=0)  # (T, Bp, Hp)
    # TODO(synk): fuse the embedding gather into the kernel (scalar-prefetch token ids
    # into SMEM, per-tile DMA gather from an HBM-resident table) to avoid materializing
    # x in HBM — most valuable on v5e's lower HBM bandwidth.

    kernel = functools.partial(_elman_kernel, sub_block=sub_block,
                               recur_unroll=recur_unroll)

    grid = (n_b, n_t)
    in_specs = [
        pl.BlockSpec((Tb, Bb, Hp), lambda b, t: (t, b, 0)),   # x (streamed over T)
        pl.BlockSpec((Hp, Cp), lambda b, t: (0, 0)),          # w1x (resident)
        pl.BlockSpec((Cp, Cp), lambda b, t: (0, 0)),          # w1h (resident)
        pl.BlockSpec((1, Cp), lambda b, t: (0, 0)),           # b1
        pl.BlockSpec((Cp, Hp), lambda b, t: (0, 0)),          # w2 (resident)
        pl.BlockSpec((1, Hp), lambda b, t: (0, 0)),           # b2
        pl.BlockSpec((Hp, NCp), lambda b, t: (0, 0)),         # w3 (resident)
        pl.BlockSpec((1, NCp), lambda b, t: (0, 0)),          # b3
    ]
    out_specs = (
        pl.BlockSpec((Bb, NCp), lambda b, t: (b, 0)),         # logits (lane-dense, padded)
        pl.BlockSpec((Bb, Cp), lambda b, t: (b, 0)),          # hidden
    )
    scratch_shapes = [
        pltpu.VMEM((Bb, Cp), f32),        # h carried across time tiles
        pltpu.VMEM((Bb, Hp), f32),        # running relu-max over time
        pltpu.VMEM((Tb, Bb, Cp), cdt),    # shared xp / h-history buffer (compute dtype)
    ]

    logits_p, hidden_p = pl.pallas_call(
        kernel,
        out_shape=(jax.ShapeDtypeStruct((Bp, NCp), f32),
                   jax.ShapeDtypeStruct((Bp, Cp), f32)),
        grid=grid,
        in_specs=in_specs,
        out_specs=out_specs,
        scratch_shapes=scratch_shapes,
        compiler_params=pltpu.CompilerParams(
            dimension_semantics=("parallel", "arbitrary"),
            vmem_limit_bytes=vmem_limit),
    )(x, w1x_p, w1h_p, b1_p, w2_p, b2_p, w3_p, b3_p)

    return logits_p[:B, :NC], hidden_p[:B, :C]


def make_params(key, vocab_size, hidden, context, num_cls):
    ks = jax.random.split(key, 8)
    s = 0.1
    emb = jax.random.normal(ks[0], (vocab_size, hidden), jnp.float32)
    # lin1: Linear(hidden + context -> context); stored transposed and split into x/h parts
    w1x = s * jax.random.normal(ks[1], (hidden, context), jnp.float32)
    w1h = s * jax.random.normal(ks[2], (context, context), jnp.float32)
    b1 = s * jax.random.normal(ks[3], (1, context), jnp.float32)
    # lin2: Linear(context -> hidden)
    w2 = s * jax.random.normal(ks[4], (context, hidden), jnp.float32)
    b2 = s * jax.random.normal(ks[5], (1, hidden), jnp.float32)
    # linear2: Linear(hidden -> num_cls)
    w3 = s * jax.random.normal(ks[6], (hidden, num_cls), jnp.float32)
    b3 = s * jax.random.normal(ks[7], (1, num_cls), jnp.float32)
    return emb, w1x, w1h, b1, w2, b2, w3, b3


def reference_forward(tokens, params):
    emb, w1x, w1h, b1, w2, b2, w3, b3 = params
    B, T = tokens.shape
    C = w1h.shape[0]
    x = jnp.take(emb, tokens, axis=0)  # (B, T, H)
    h = jnp.zeros((B, C), jnp.float32)
    outs = []
    for t in range(T):
        pre = x[:, t, :] @ w1x + h @ w1h + b1
        h = jax.nn.sigmoid(pre)
        outs.append(h @ w2 + b2)
    seq = jnp.stack(outs, axis=1)                 # (B, T, H)
    pooled = jnp.max(jax.nn.relu(seq), axis=1)    # (B, H)
    logits = pooled @ w3 + b3
    return logits, h


if __name__ == "__main__":
    key = jax.random.PRNGKey(0)
    vocab_size, hidden, context, num_cls = 50, 32, 32, 2
    B, T = 2, 8

    kp, kt = jax.random.split(key)
    params = make_params(kp, vocab_size, hidden, context, num_cls)
    tokens = jax.random.randint(kt, (B, T), 0, vocab_size, dtype=jnp.int32)

    ref_logits, ref_hidden = reference_forward(tokens, params)

    # f32 MXU-operand path: tight structural check against the pure-JAX reference
    # (all scratch/sigmoid stay f32 on this path, so semantics match to matmul rounding).
    logits32, hidden32 = jax.block_until_ready(
        elman_forward(tokens, params, compute_dtype=jnp.float32))
    assert jnp.allclose(logits32, ref_logits, atol=2e-3, rtol=2e-3)
    assert jnp.allclose(hidden32, ref_hidden, atol=2e-3, rtol=2e-3)

    # bf16 fast path (bf16 MXU operands, bf16 shared xp/h scratch, bf16 sigmoid;
    # f32 accumulation): looser tolerance.
    logits, hidden_state = jax.block_until_ready(elman_forward(tokens, params))
    assert jnp.allclose(logits, ref_logits, atol=4e-2, rtol=4e-2)
    assert jnp.allclose(hidden_state, ref_hidden, atol=4e-2, rtol=4e-2)

    print("KERNEL_OK")
</pallas_src>

<mosaic_0001>
module attributes {stable_mosaic.version = 11 : i64} {
  func.func @_elman_kernel(%arg0: i32, %arg1: i32, %arg2: memref<8x8x128xf32, #tpu.memory_space<vmem>>, %arg3: memref<128x128xf32, #tpu.memory_space<vmem>>, %arg4: memref<128x128xf32, #tpu.memory_space<vmem>>, %arg5: memref<1x128xf32, #tpu.memory_space<vmem>>, %arg6: memref<128x128xf32, #tpu.memory_space<vmem>>, %arg7: memref<1x128xf32, #tpu.memory_space<vmem>>, %arg8: memref<128x128xf32, #tpu.memory_space<vmem>>, %arg9: memref<1x128xf32, #tpu.memory_space<vmem>>, %arg10: memref<8x128xf32, #tpu.memory_space<vmem>>, %arg11: memref<8x128xf32, #tpu.memory_space<vmem>>, %arg12: memref<8x128xf32, #tpu.memory_space<vmem>>, %arg13: memref<8x128xf32, #tpu.memory_space<vmem>>, %arg14: memref<8x8x128xf32, #tpu.memory_space<vmem>>) attributes {dimension_semantics = [#tpu.dimension_semantics<parallel>, #tpu.dimension_semantics<arbitrary>], iteration_bounds = array<i64: 1, 1>, scalar_prefetch = 0 : i64, scratch_operands = 3 : i64, tpu.core_type = #tpu.core_type<tc>, window_params = [{transform_indices = @transform_0, window_bounds = array<i64: 8, 8, 128>}, {pipeline_mode = #tpu.pipeline_mode<synchronous>, transform_indices = @transform_1, window_bounds = array<i64: 128, 128>}, {pipeline_mode = #tpu.pipeline_mode<synchronous>, transform_indices = @transform_2, window_bounds = array<i64: 128, 128>}, {pipeline_mode = #tpu.pipeline_mode<synchronous>, transform_indices = @transform_3, window_bounds = array<i64: 1, 128>}, {pipeline_mode = #tpu.pipeline_mode<synchronous>, transform_indices = @transform_4, window_bounds = array<i64: 128, 128>}, {pipeline_mode = #tpu.pipeline_mode<synchronous>, transform_indices = @transform_5, window_bounds = array<i64: 1, 128>}, {pipeline_mode = #tpu.pipeline_mode<synchronous>, transform_indices = @transform_6, window_bounds = array<i64: 128, 128>}, {pipeline_mode = #tpu.pipeline_mode<synchronous>, transform_indices = @transform_7, window_bounds = array<i64: 1, 128>}, {transform_indices = @transform_8, window_bounds = array<i64: 8, 128>}, {transform_indices = @transform_9, window_bounds = array<i64: 8, 128>}]} {
    %c0_i32 = arith.constant 0 : i32
    %0 = arith.cmpi eq, %arg1, %c0_i32 : i32
    %1 = arith.extui %0 : i1 to i32
    %c0_i32_0 = arith.constant 0 : i32
    %2 = arith.cmpi ne, %1, %c0_i32_0 : i32
    scf.if %2 {
      %cst_86 = arith.constant 0.000000e+00 : f32
      %167 = vector.broadcast %cst_86 : f32 to vector<8x128xf32>
      %c0_87 = arith.constant 0 : index
      %c0_88 = arith.constant 0 : index
      %168 = vector.load %arg12[%c0_87, %c0_88] : memref<8x128xf32, #tpu.memory_space<vmem>>, vector<8x128xf32>
      tpu.vector_store %arg12[%c0_87, %c0_88], %167 {strides = array<i32>} : memref<8x128xf32, #tpu.memory_space<vmem>>, vector<8x128xf32>,
      %cst_89 = arith.constant 0.000000e+00 : f32
      %169 = vector.broadcast %cst_89 : f32 to vector<8x128xf32>
      %c0_90 = arith.constant 0 : index
      %c0_91 = arith.constant 0 : index
      %170 = vector.load %arg13[%c0_90, %c0_91] : memref<8x128xf32, #tpu.memory_space<vmem>>, vector<8x128xf32>
      tpu.vector_store %arg13[%c0_90, %c0_91], %169 {strides = array<i32>} : memref<8x128xf32, #tpu.memory_space<vmem>>, vector<8x128xf32>,
    } else {
    }
    %c0 = arith.constant 0 : index
    %c0_1 = arith.constant 0 : index
    %3 = vector.load %arg3[%c0, %c0_1] : memref<128x128xf32, #tpu.memory_space<vmem>>, vector<128x128xf32>
    %c0_i32_2 = arith.constant 0 : i32
    %c1_i32 = arith.constant 1 : i32
    %4 = arith.muli %c0_i32_2, %c1_i32 : i32
    %c0_i32_3 = arith.constant 0 : i32
    %5 = arith.addi %c0_i32_3, %4 : i32
    %c8_i32 = arith.constant 8 : i32
    %6 = arith.muli %5, %c8_i32 : i32
    %7 = tpu.assume_multiple %6, 8 : i32
    %8 = arith.index_cast %7 : i32 to index
    %c0_4 = arith.constant 0 : index
    %c0_5 = arith.constant 0 : index
    %9 = vector.load %arg2[%8, %c0_4, %c0_5] : memref<8x8x128xf32, #tpu.memory_space<vmem>>, vector<8x8x128xf32>
    %10 = vector.shape_cast %9 : vector<8x8x128xf32> to vector<64x128xf32>
    %cst = arith.constant dense<0.000000e+00> : vector<64x128xf32>
    %11 = tpu.matmul %10, %3, %cst {dimension_numbers = #tpu.dot_dimension_numbers<[1], [0], [0], [1], [0, 0, 1, 1], [], []>} : vector<64x128xf32>, vector<128x128xf32>, vector<64x128xf32> -> vector<64x128xf32>
    %12 = vector.shape_cast %11 : vector<64x128xf32> to vector<8x8x128xf32>
    %13 = arith.index_cast %7 : i32 to index
    %c0_6 = arith.constant 0 : index
    %c0_7 = arith.constant 0 : index
    %14 = vector.load %arg14[%13, %c0_6, %c0_7] : memref<8x8x128xf32, #tpu.memory_space<vmem>>, vector<8x8x128xf32>
    tpu.vector_store %arg14[%13, %c0_6, %c0_7], %12 {strides = array<i32>} : memref<8x8x128xf32, #tpu.memory_space<vmem>>, vector<8x8x128xf32>,
    %c1_i32_8 = arith.constant 1 : i32
    %c0_9 = arith.constant 0 : index
    %c0_10 = arith.constant 0 : index
    %15 = vector.load %arg4[%c0_9, %c0_10] : memref<128x128xf32, #tpu.memory_space<vmem>>, vector<128x128xf32>
    %c0_11 = arith.constant 0 : index
    %c0_12 = arith.constant 0 : index
    %16 = vector.load %arg5[%c0_11, %c0_12] : memref<1x128xf32, #tpu.memory_space<vmem>>, vector<1x128xf32>
    %c0_13 = arith.constant 0 : index
    %c0_14 = arith.constant 0 : index
    %17 = vector.load %arg12[%c0_13, %c0_14] : memref<8x128xf32, #tpu.memory_space<vmem>>, vector<8x128xf32>
    %c0_i32_15 = arith.constant 0 : i32
    %cst_16 = arith.constant dense<0.000000e+00> : vector<8x128xf32>
    %18 = tpu.matmul %17, %15, %cst_16 {dimension_numbers = #tpu.dot_dimension_numbers<[1], [0], [0], [1], [0, 0, 1, 1], [], []>} : vector<8x128xf32>, vector<128x128xf32>, vector<8x128xf32> -> vector<8x128xf32>
    %19 = arith.index_cast %c0_i32_15 : i32 to index
    %c0_17 = arith.constant 0 : index
    %c0_18 = arith.constant 0 : index
    %20 = vector.load %arg14[%19, %c0_17, %c0_18] : memref<8x8x128xf32, #tpu.memory_space<vmem>>, vector<1x8x128xf32>
    %21 = vector.shape_cast %20 : vector<1x8x128xf32> to vector<8x128xf32>
    %22 = vector.broadcast %16 : vector<1x128xf32> to vector<8x128xf32>
    %23 = arith.addf %21, %22 : vector<8x128xf32>
    %24 = arith.addf %23, %18 : vector<8x128xf32>
    %25 = arith.negf %24 : vector<8x128xf32>
    %26 = math.exp %25 : vector<8x128xf32>
    %cst_19 = arith.constant 1.000000e+00 : f32
    %27 = vector.broadcast %cst_19 : f32 to vector<8x128xf32>
    %28 = arith.addf %27, %26 : vector<8x128xf32>
    %29 = arith.divf %27, %28 : vector<8x128xf32>
    %30 = arith.index_cast %c0_i32_15 : i32 to index
    %c0_20 = arith.constant 0 : index
    %c0_21 = arith.constant 0 : index
    %31 = vector.load %arg14[%30, %c0_20, %c0_21] : memref<8x8x128xf32, #tpu.memory_space<vmem>>, vector<1x8x128xf32>
    %32 = vector.shape_cast %31 : vector<1x8x128xf32> to vector<8x128xf32>
    %33 = vector.shape_cast %29 : vector<8x128xf32> to vector<1x8x128xf32>
    tpu.vector_store %arg14[%30, %c0_20, %c0_21], %33 {strides = array<i32>} : memref<8x8x128xf32, #tpu.memory_space<vmem>>, vector<1x8x128xf32>,
    %c1_i32_22 = arith.constant 1 : i32
    %cst_23 = arith.constant dense<0.000000e+00> : vector<8x128xf32>
    %34 = tpu.matmul %29, %15, %cst_23 {dimension_numbers = #tpu.dot_dimension_numbers<[1], [0], [0], [1], [0, 0, 1, 1], [], []>} : vector<8x128xf32>, vector<128x128xf32>, vector<8x128xf32> -> vector<8x128xf32>
    %35 = arith.index_cast %c1_i32_22 : i32 to index
    %c0_24 = arith.constant 0 : index
    %c0_25 = arith.constant 0 : index
    %36 = vector.load %arg14[%35, %c0_24, %c0_25] : memref<8x8x128xf32, #tpu.memory_space<vmem>>, vector<1x8x128xf32>
    %37 = vector.shape_cast %36 : vector<1x8x128xf32> to vector<8x128xf32>
    %38 = vector.broadcast %16 : vector<1x128xf32> to vector<8x128xf32>
    %39 = arith.addf %37, %38 : vector<8x128xf32>
    %40 = arith.addf %39, %34 : vector<8x128xf32>
    %41 = arith.negf %40 : vector<8x128xf32>
    %42 = math.exp %41 : vector<8x128xf32>
    %cst_26 = arith.constant 1.000000e+00 : f32
    %43 = vector.broadcast %cst_26 : f32 to vector<8x128xf32>
    %44 = arith.addf %43, %42 : vector<8x128xf32>
    %45 = arith.divf %43, %44 : vector<8x128xf32>
    %46 = arith.index_cast %c1_i32_22 : i32 to index
    %c0_27 = arith.constant 0 : index
    %c0_28 = arith.constant 0 : index
    %47 = vector.load %arg14[%46, %c0_27, %c0_28] : memref<8x8x128xf32, #tpu.memory_space<vmem>>, vector<1x8x128xf32>
    %48 = vector.shape_cast %47 : vector<1x8x128xf32> to vector<8x128xf32>
    %49 = vector.shape_cast %45 : vector<8x128xf32> to vector<1x8x128xf32>
    tpu.vector_store %arg14[%46, %c0_27, %c0_28], %49 {strides = array<i32>} : memref<8x8x128xf32, #tpu.memory_space<vmem>>, vector<1x8x128xf32>,
    %c2_i32 = arith.constant 2 : i32
    %cst_29 = arith.constant dense<0.000000e+00> : vector<8x128xf32>
    %50 = tpu.matmul %45, %15, %cst_29 {dimension_numbers = #tpu.dot_dimension_numbers<[1], [0], [0], [1], [0, 0, 1, 1], [], []>} : vector<8x128xf32>, vector<128x128xf32>, vector<8x128xf32> -> vector<8x128xf32>
    %51 = arith.index_cast %c2_i32 : i32 to index
    %c0_30 = arith.constant 0 : index
    %c0_31 = arith.constant 0 : index
    %52 = vector.load %arg14[%51, %c0_30, %c0_31] : memref<8x8x128xf32, #tpu.memory_space<vmem>>, vector<1x8x128xf32>
    %53 = vector.shape_cast %52 : vector<1x8x128xf32> to vector<8x128xf32>
    %54 = vector.broadcast %16 : vector<1x128xf32> to vector<8x128xf32>
    %55 = arith.addf %53, %54 : vector<8x128xf32>
    %56 = arith.addf %55, %50 : vector<8x128xf32>
    %57 = arith.negf %56 : vector<8x128xf32>
    %58 = math.exp %57 : vector<8x128xf32>
    %cst_32 = arith.constant 1.000000e+00 : f32
    %59 = vector.broadcast %cst_32 : f32 to vector<8x128xf32>
    %60 = arith.addf %59, %58 : vector<8x128xf32>
    %61 = arith.divf %59, %60 : vector<8x128xf32>
    %62 = arith.index_cast %c2_i32 : i32 to index
    %c0_33 = arith.constant 0 : index
    %c0_34 = arith.constant 0 : index
    %63 = vector.load %arg14[%62, %c0_33, %c0_34] : memref<8x8x128xf32, #tpu.memory_space<vmem>>, vector<1x8x128xf32>
    %64 = vector.shape_cast %63 : vector<1x8x128xf32> to vector<8x128xf32>
    %65 = vector.shape_cast %61 : vector<8x128xf32> to vector<1x8x128xf32>
    tpu.vector_store %arg14[%62, %c0_33, %c0_34], %65 {strides = array<i32>} : memref<8x8x128xf32, #tpu.memory_space<vmem>>, vector<1x8x128xf32>,
    %c3_i32 = arith.constant 3 : i32
    %cst_35 = arith.constant dense<0.000000e+00> : vector<8x128xf32>
    %66 = tpu.matmul %61, %15, %cst_35 {dimension_numbers = #tpu.dot_dimension_numbers<[1], [0], [0], [1], [0, 0, 1, 1], [], []>} : vector<8x128xf32>, vector<128x128xf32>, vector<8x128xf32> -> vector<8x128xf32>
    %67 = arith.index_cast %c3_i32 : i32 to index
    %c0_36 = arith.constant 0 : index
    %c0_37 = arith.constant 0 : index
    %68 = vector.load %arg14[%67, %c0_36, %c0_37] : memref<8x8x128xf32, #tpu.memory_space<vmem>>, vector<1x8x128xf32>
    %69 = vector.shape_cast %68 : vector<1x8x128xf32> to vector<8x128xf32>
    %70 = vector.broadcast %16 : vector<1x128xf32> to vector<8x128xf32>
    %71 = arith.addf %69, %70 : vector<8x128xf32>
    %72 = arith.addf %71, %66 : vector<8x128xf32>
    %73 = arith.negf %72 : vector<8x128xf32>
    %74 = math.exp %73 : vector<8x128xf32>
    %cst_38 = arith.constant 1.000000e+00 : f32
    %75 = vector.broadcast %cst_38 : f32 to vector<8x128xf32>
    %76 = arith.addf %75, %74 : vector<8x128xf32>
    %77 = arith.divf %75, %76 : vector<8x128xf32>
    %78 = arith.index_cast %c3_i32 : i32 to index
    %c0_39 = arith.constant 0 : index
    %c0_40 = arith.constant 0 : index
    %79 = vector.load %arg14[%78, %c0_39, %c0_40] : memref<8x8x128xf32, #tpu.memory_space<vmem>>, vector<1x8x128xf32>
    %80 = vector.shape_cast %79 : vector<1x8x128xf32> to vector<8x128xf32>
    %81 = vector.shape_cast %77 : vector<8x128xf32> to vector<1x8x128xf32>
    tpu.vector_store %arg14[%78, %c0_39, %c0_40], %81 {strides = array<i32>} : memref<8x8x128xf32, #tpu.memory_space<vmem>>, vector<1x8x128xf32>,
    %c4_i32 = arith.constant 4 : i32
    %cst_41 = arith.constant dense<0.000000e+00> : vector<8x128xf32>
    %82 = tpu.matmul %77, %15, %cst_41 {dimension_numbers = #tpu.dot_dimension_numbers<[1], [0], [0], [1], [0, 0, 1, 1], [], []>} : vector<8x128xf32>, vector<128x128xf32>, vector<8x128xf32> -> vector<8x128xf32>
    %83 = arith.index_cast %c4_i32 : i32 to index
    %c0_42 = arith.constant 0 : index
    %c0_43 = arith.constant 0 : index
    %84 = vector.load %arg14[%83, %c0_42, %c0_43] : memref<8x8x128xf32, #tpu.memory_space<vmem>>, vector<1x8x128xf32>
    %85 = vector.shape_cast %84 : vector<1x8x128xf32> to vector<8x128xf32>
    %86 = vector.broadcast %16 : vector<1x128xf32> to vector<8x128xf32>
    %87 = arith.addf %85, %86 : vector<8x128xf32>
    %88 = arith.addf %87, %82 : vector<8x128xf32>
    %89 = arith.negf %88 : vector<8x128xf32>
    %90 = math.exp %89 : vector<8x128xf32>
    %cst_44 = arith.constant 1.000000e+00 : f32
    %91 = vector.broadcast %cst_44 : f32 to vector<8x128xf32>
    %92 = arith.addf %91, %90 : vector<8x128xf32>
    %93 = arith.divf %91, %92 : vector<8x128xf32>
    %94 = arith.index_cast %c4_i32 : i32 to index
    %c0_45 = arith.constant 0 : index
    %c0_46 = arith.constant 0 : index
    %95 = vector.load %arg14[%94, %c0_45, %c0_46] : memref<8x8x128xf32, #tpu.memory_space<vmem>>, vector<1x8x128xf32>
    %96 = vector.shape_cast %95 : vector<1x8x128xf32> to vector<8x128xf32>
    %97 = vector.shape_cast %93 : vector<8x128xf32> to vector<1x8x128xf32>
    tpu.vector_store %arg14[%94, %c0_45, %c0_46], %97 {strides = array<i32>} : memref<8x8x128xf32, #tpu.memory_space<vmem>>, vector<1x8x128xf32>,
    %c5_i32 = arith.constant 5 : i32
    %cst_47 = arith.constant dense<0.000000e+00> : vector<8x128xf32>
    %98 = tpu.matmul %93, %15, %cst_47 {dimension_numbers = #tpu.dot_dimension_numbers<[1], [0], [0], [1], [0, 0, 1, 1], [], []>} : vector<8x128xf32>, vector<128x128xf32>, vector<8x128xf32> -> vector<8x128xf32>
    %99 = arith.index_cast %c5_i32 : i32 to index
    %c0_48 = arith.constant 0 : index
    %c0_49 = arith.constant 0 : index
    %100 = vector.load %arg14[%99, %c0_48, %c0_49] : memref<8x8x128xf32, #tpu.memory_space<vmem>>, vector<1x8x128xf32>
    %101 = vector.shape_cast %100 : vector<1x8x128xf32> to vector<8x128xf32>
    %102 = vector.broadcast %16 : vector<1x128xf32> to vector<8x128xf32>
    %103 = arith.addf %101, %102 : vector<8x128xf32>
    %104 = arith.addf %103, %98 : vector<8x128xf32>
    %105 = arith.negf %104 : vector<8x128xf32>
    %106 = math.exp %105 : vector<8x128xf32>
    %cst_50 = arith.constant 1.000000e+00 : f32
    %107 = vector.broadcast %cst_50 : f32 to vector<8x128xf32>
    %108 = arith.addf %107, %106 : vector<8x128xf32>
    %109 = arith.divf %107, %108 : vector<8x128xf32>
    %110 = arith.index_cast %c5_i32 : i32 to index
    %c0_51 = arith.constant 0 : index
    %c0_52 = arith.constant 0 : index
    %111 = vector.load %arg14[%110, %c0_51, %c0_52] : memref<8x8x128xf32, #tpu.memory_space<vmem>>, vector<1x8x128xf32>
    %112 = vector.shape_cast %111 : vector<1x8x128xf32> to vector<8x128xf32>
    %113 = vector.shape_cast %109 : vector<8x128xf32> to vector<1x8x128xf32>
    tpu.vector_store %arg14[%110, %c0_51, %c0_52], %113 {strides = array<i32>} : memref<8x8x128xf32, #tpu.memory_space<vmem>>, vector<1x8x128xf32>,
    %c6_i32 = arith.constant 6 : i32
    %cst_53 = arith.constant dense<0.000000e+00> : vector<8x128xf32>
    %114 = tpu.matmul %109, %15, %cst_53 {dimension_numbers = #tpu.dot_dimension_numbers<[1], [0], [0], [1], [0, 0, 1, 1], [], []>} : vector<8x128xf32>, vector<128x128xf32>, vector<8x128xf32> -> vector<8x128xf32>
    %115 = arith.index_cast %c6_i32 : i32 to index
    %c0_54 = arith.constant 0 : index
    %c0_55 = arith.constant 0 : index
    %116 = vector.load %arg14[%115, %c0_54, %c0_55] : memref<8x8x128xf32, #tpu.memory_space<vmem>>, vector<1x8x128xf32>
    %117 = vector.shape_cast %116 : vector<1x8x128xf32> to vector<8x128xf32>
    %118 = vector.broadcast %16 : vector<1x128xf32> to vector<8x128xf32>
    %119 = arith.addf %117, %118 : vector<8x128xf32>
    %120 = arith.addf %119, %114 : vector<8x128xf32>
    %121 = arith.negf %120 : vector<8x128xf32>
    %122 = math.exp %121 : vector<8x128xf32>
    %cst_56 = arith.constant 1.000000e+00 : f32
    %123 = vector.broadcast %cst_56 : f32 to vector<8x128xf32>
    %124 = arith.addf %123, %122 : vector<8x128xf32>
    %125 = arith.divf %123, %124 : vector<8x128xf32>
    %126 = arith.index_cast %c6_i32 : i32 to index
    %c0_57 = arith.constant 0 : index
    %c0_58 = arith.constant 0 : index
    %127 = vector.load %arg14[%126, %c0_57, %c0_58] : memref<8x8x128xf32, #tpu.memory_space<vmem>>, vector<1x8x128xf32>
    %128 = vector.shape_cast %127 : vector<1x8x128xf32> to vector<8x128xf32>
    %129 = vector.shape_cast %125 : vector<8x128xf32> to vector<1x8x128xf32>
    tpu.vector_store %arg14[%126, %c0_57, %c0_58], %129 {strides = array<i32>} : memref<8x8x128xf32, #tpu.memory_space<vmem>>, vector<1x8x128xf32>,
    %c7_i32 = arith.constant 7 : i32
    %cst_59 = arith.constant dense<0.000000e+00> : vector<8x128xf32>
    %130 = tpu.matmul %125, %15, %cst_59 {dimension_numbers = #tpu.dot_dimension_numbers<[1], [0], [0], [1], [0, 0, 1, 1], [], []>} : vector<8x128xf32>, vector<128x128xf32>, vector<8x128xf32> -> vector<8x128xf32>
    %131 = arith.index_cast %c7_i32 : i32 to index
    %c0_60 = arith.constant 0 : index
    %c0_61 = arith.constant 0 : index
    %132 = vector.load %arg14[%131, %c0_60, %c0_61] : memref<8x8x128xf32, #tpu.memory_space<vmem>>, vector<1x8x128xf32>
    %133 = vector.shape_cast %132 : vector<1x8x128xf32> to vector<8x128xf32>
    %134 = vector.broadcast %16 : vector<1x128xf32> to vector<8x128xf32>
    %135 = arith.addf %133, %134 : vector<8x128xf32>
    %136 = arith.addf %135, %130 : vector<8x128xf32>
    %137 = arith.negf %136 : vector<8x128xf32>
    %138 = math.exp %137 : vector<8x128xf32>
    %cst_62 = arith.constant 1.000000e+00 : f32
    %139 = vector.broadcast %cst_62 : f32 to vector<8x128xf32>
    %140 = arith.addf %139, %138 : vector<8x128xf32>
    %141 = arith.divf %139, %140 : vector<8x128xf32>
    %142 = arith.index_cast %c7_i32 : i32 to index
    %c0_63 = arith.constant 0 : index
    %c0_64 = arith.constant 0 : index
    %143 = vector.load %arg14[%142, %c0_63, %c0_64] : memref<8x8x128xf32, #tpu.memory_space<vmem>>, vector<1x8x128xf32>
    %144 = vector.shape_cast %143 : vector<1x8x128xf32> to vector<8x128xf32>
    %145 = vector.shape_cast %141 : vector<8x128xf32> to vector<1x8x128xf32>
    tpu.vector_store %arg14[%142, %c0_63, %c0_64], %145 {strides = array<i32>} : memref<8x8x128xf32, #tpu.memory_space<vmem>>, vector<1x8x128xf32>,
    %c8_i32_65 = arith.constant 8 : i32
    %c0_66 = arith.constant 0 : index
    %c0_67 = arith.constant 0 : index
    %146 = vector.load %arg12[%c0_66, %c0_67] : memref<8x128xf32, #tpu.memory_space<vmem>>, vector<8x128xf32>
    tpu.vector_store %arg12[%c0_66, %c0_67], %141 {strides = array<i32>} : memref<8x128xf32, #tpu.memory_space<vmem>>, vector<8x128xf32>,
    %c0_68 = arith.constant 0 : index
    %c0_69 = arith.constant 0 : index
    %147 = vector.load %arg6[%c0_68, %c0_69] : memref<128x128xf32, #tpu.memory_space<vmem>>, vector<128x128xf32>
    %c0_70 = arith.constant 0 : index
    %c0_71 = arith.constant 0 : index
    %148 = vector.load %arg7[%c0_70, %c0_71] : memref<1x128xf32, #tpu.memory_space<vmem>>, vector<1x128xf32>
    %c0_72 = arith.constant 0 : index
    %c0_73 = arith.constant 0 : index
    %149 = vector.load %arg13[%c0_72, %c0_73] : memref<8x128xf32, #tpu.memory_space<vmem>>, vector<8x128xf32>
    %c0_i32_74 = arith.constant 0 : i32
    %c8_i32_75 = arith.constant 8 : i32
    %150 = arith.muli %c0_i32_74, %c8_i32_75 : i32
    %151 = tpu.assume_multiple %150, 8 : i32
    %152 = arith.index_cast %151 : i32 to index
    %c0_76 = arith.constant 0 : index
    %c0_77 = arith.constant 0 : index
    %153 = vector.load %arg14[%152, %c0_76, %c0_77] : memref<8x8x128xf32, #tpu.memory_space<vmem>>, vector<8x8x128xf32>
    %154 = vector.shape_cast %153 : vector<8x8x128xf32> to vector<64x128xf32>
    %cst_78 = arith.constant dense<0.000000e+00> : vector<64x128xf32>
    %155 = tpu.matmul %154, %147, %cst_78 {dimension_numbers = #tpu.dot_dimension_numbers<[1], [0], [0], [1], [0, 0, 1, 1], [], []>} : vector<64x128xf32>, vector<128x128xf32>, vector<64x128xf32> -> vector<64x128xf32>
    %156 = vector.broadcast %148 : vector<1x128xf32> to vector<64x128xf32>
    %157 = arith.addf %155, %156 : vector<64x128xf32>
    %cst_79 = arith.constant 0.000000e+00 : f32
    %158 = vector.broadcast %cst_79 : f32 to vector<64x128xf32>
    %159 = arith.maximumf %157, %158 : vector<64x128xf32>
    %160 = vector.shape_cast %159 : vector<64x128xf32> to vector<8x8x128xf32>
    %cst_80 = arith.constant dense<0xFF800000> : vector<8x128xf32>
    %161 = vector.multi_reduction <maximumf>, %160, %cst_80 [0] : vector<8x8x128xf32> to vector<8x128xf32>
    %162 = arith.maximumf %149, %161 : vector<8x128xf32>
    %c1_i32_81 = arith.constant 1 : i32
    %c0_82 = arith.constant 0 : index
    %c0_83 = arith.constant 0 : index
    %163 = vector.load %arg13[%c0_82, %c0_83] : memref<8x128xf32, #tpu.memory_space<vmem>>, vector<8x128xf32>
    tpu.vector_store %arg13[%c0_82, %c0_83], %162 {strides = array<i32>} : memref<8x128xf32, #tpu.memory_space<vmem>>, vector<8x128xf32>,
    %c0_i32_84 = arith.constant 0 : i32
    %164 = arith.cmpi eq, %arg1, %c0_i32_84 : i32
    %165 = arith.extui %164 : i1 to i32
    %c0_i32_85 = arith.constant 0 : i32
    %166 = arith.cmpi ne, %165, %c0_i32_85 : i32
    scf.if %166 {
      %c0_86 = arith.constant 0 : index
      %c0_87 = arith.constant 0 : index
      %167 = vector.load %arg13[%c0_86, %c0_87] : memref<8x128xf32, #tpu.memory_space<vmem>>, vector<8x128xf32>
      %c0_88 = arith.constant 0 : index
      %c0_89 = arith.constant 0 : index
      %168 = vector.load %arg8[%c0_88, %c0_89] : memref<128x128xf32, #tpu.memory_space<vmem>>, vector<128x128xf32>
      %cst_90 = arith.constant dense<0.000000e+00> : vector<8x128xf32>
      %169 = tpu.matmul %167, %168, %cst_90 {dimension_numbers = #tpu.dot_dimension_numbers<[1], [0], [0], [1], [0, 0, 1, 1], [], []>} : vector<8x128xf32>, vector<128x128xf32>, vector<8x128xf32> -> vector<8x128xf32>
      %c0_91 = arith.constant 0 : index
      %c0_92 = arith.constant 0 : index
      %170 = vector.load %arg9[%c0_91, %c0_92] : memref<1x128xf32, #tpu.memory_space<vmem>>, vector<1x128xf32>
      %171 = vector.broadcast %170 : vector<1x128xf32> to vector<8x128xf32>
      %172 = arith.addf %169, %171 : vector<8x128xf32>
      %c0_93 = arith.constant 0 : index
      %c0_94 = arith.constant 0 : index
      %173 = vector.load %arg10[%c0_93, %c0_94] : memref<8x128xf32, #tpu.memory_space<vmem>>, vector<8x128xf32>
      tpu.vector_store %arg10[%c0_93, %c0_94], %172 {strides = array<i32>} : memref<8x128xf32, #tpu.memory_space<vmem>>, vector<8x128xf32>,
      %c0_95 = arith.constant 0 : index
      %c0_96 = arith.constant 0 : index
      %174 = vector.load %arg12[%c0_95, %c0_96] : memref<8x128xf32, #tpu.memory_space<vmem>>, vector<8x128xf32>
      %c0_97 = arith.constant 0 : index
      %c0_98 = arith.constant 0 : index
      %175 = vector.load %arg11[%c0_97, %c0_98] : memref<8x128xf32, #tpu.memory_space<vmem>>, vector<8x128xf32>
      tpu.vector_store %arg11[%c0_97, %c0_98], %174 {strides = array<i32>} : memref<8x128xf32, #tpu.memory_space<vmem>>, vector<8x128xf32>,
    } else {
    }
    return
  }
  func.func @transform_0(%arg0: i32, %arg1: i32) -> (i32, i32, i32) {
    %c0_i32 = arith.constant 0 : i32
    %c0_i32_0 = arith.constant 0 : i32
    return %arg1, %arg0, %c0_i32 : i32, i32, i32
  }
  func.func @transform_1(%arg0: i32, %arg1: i32) -> (i32, i32) {
    %c0_i32 = arith.constant 0 : i32
    %c0_i32_0 = arith.constant 0 : i32
    %c0_i32_1 = arith.constant 0 : i32
    return %c0_i32, %c0_i32_0 : i32, i32
  }
  func.func @transform_2(%arg0: i32, %arg1: i32) -> (i32, i32) {
    %c0_i32 = arith.constant 0 : i32
    %c0_i32_0 = arith.constant 0 : i32
    %c0_i32_1 = arith.constant 0 : i32
    return %c0_i32, %c0_i32_0 : i32, i32
  }
  func.func @transform_3(%arg0: i32, %arg1: i32) -> (i32, i32) {
    %c0_i32 = arith.constant 0 : i32
    %c0_i32_0 = arith.constant 0 : i32
    %c0_i32_1 = arith.constant 0 : i32
    return %c0_i32, %c0_i32_0 : i32, i32
  }
  func.func @transform_4(%arg0: i32, %arg1: i32) -> (i32, i32) {
    %c0_i32 = arith.constant 0 : i32
    %c0_i32_0 = arith.constant 0 : i32
    %c0_i32_1 = arith.constant 0 : i32
    return %c0_i32, %c0_i32_0 : i32, i32
  }
  func.func @transform_5(%arg0: i32, %arg1: i32) -> (i32, i32) {
    %c0_i32 = arith.constant 0 : i32
    %c0_i32_0 = arith.constant 0 : i32
    %c0_i32_1 = arith.constant 0 : i32
    return %c0_i32, %c0_i32_0 : i32, i32
  }
  func.func @transform_6(%arg0: i32, %arg1: i32) -> (i32, i32) {
    %c0_i32 = arith.constant 0 : i32
    %c0_i32_0 = arith.constant 0 : i32
    %c0_i32_1 = arith.constant 0 : i32
    return %c0_i32, %c0_i32_0 : i32, i32
  }
  func.func @transform_7(%arg0: i32, %arg1: i32) -> (i32, i32) {
    %c0_i32 = arith.constant 0 : i32
    %c0_i32_0 = arith.constant 0 : i32
    %c0_i32_1 = arith.constant 0 : i32
    return %c0_i32, %c0_i32_0 : i32, i32
  }
  func.func @transform_8(%arg0: i32, %arg1: i32) -> (i32, i32) {
    %c0_i32 = arith.constant 0 : i32
    %c0_i32_0 = arith.constant 0 : i32
    return %arg0, %c0_i32 : i32, i32
  }
  func.func @transform_9(%arg0: i32, %arg1: i32) -> (i32, i32) {
    %c0_i32 = arith.constant 0 : i32
    %c0_i32_0 = arith.constant 0 : i32
    return %arg0, %c0_i32 : i32, i32
  }
}

</mosaic_0001>

<llo_original>
// kernel: tpu_custom_call.1
$region0: #{tpu_custom_call.1}
  #allocation0 [shape = 'u32[]', space=smem, size = 0x4, offset = 0x4, fixed_abs, tag = 'smem constant byte address 0x4 - core index']
  #allocation1 [shape = 'u32[144,128]{1,0:T(1,128)}', space=vmem, size = 0x12000, scoped, tag = 'internal scratch']
  #allocation2 [shape = 'f32[8,128]{1,0:T(8,128)}', space=vmem, size = 0x1000, scoped, tag = 'scratch operand']
  #allocation3 [shape = 'f32[8,128]{1,0:T(8,128)}', space=vmem, size = 0x1000, scoped, tag = 'scratch operand']
  #allocation4 [shape = 'f32[8,8,128]{2,1,0:T(8,128)}', space=vmem, size = 0x8000, scoped, tag = 'scratch operand']
  %s0 = inlined_call_operand.hbm [shape: f32[8,8,128], index: 0, kind: input, shape index: {}]
  %s1 = inlined_call_operand.hbm [shape: f32[128,128], index: 1, kind: input, shape index: {}]
  %s2 = inlined_call_operand.hbm [shape: f32[128,128], index: 2, kind: input, shape index: {}]
  %s3 = inlined_call_operand.vmem [shape: f32[1,128], index: 3, kind: input, shape index: {}]
  %s4 = inlined_call_operand.hbm [shape: f32[128,128], index: 4, kind: input, shape index: {}]
  %s5 = inlined_call_operand.vmem [shape: f32[1,128], index: 5, kind: input, shape index: {}]
  %s6 = inlined_call_operand.hbm [shape: f32[128,128], index: 6, kind: input, shape index: {}]
  %s7 = inlined_call_operand.vmem [shape: f32[1,128], index: 7, kind: input, shape index: {}]
  %s8 = inlined_call_operand.hbm [shape: f32[8,128], index: 8, kind: output, shape index: {0}]
  %s9 = inlined_call_operand.hbm [shape: f32[8,128], index: 9, kind: output, shape index: {1}]
  %10 = xla_tuple %s8, %s9
  %s11 = sld [smem:[#allocation0]]
  $region78: #{tpu_custom_call.1} parent=0
    _
  %s13 = ssub.s32 1, %s11
  %s14 = scalar_select 0, %s13, %s11
  $region1: #{tpu_custom_call.1} parent=0
    #allocation5 [shape = 'u8[32768]{0}', space=vmem, size = 0x8000, scoped, tag = 'input window, operand 0, single buffered']
    #allocation6 [shape = 's32[1]{0}', space=sflag, size = 0x4, scoped, tag = 'scoped memory for tpu_custom_call.1']
    #allocation7 [shape = 's32[1]{0}', space=sflag, size = 0x4, scoped, tag = 'scoped memory for tpu_custom_call.1']
    #allocation8 [shape = 'u8[65536]{0}', space=vmem, size = 0x10000, scoped, tag = 'input window, operand 1, single buffered']
    #allocation9 [shape = 's32[1]{0}', space=sflag, size = 0x4, scoped, tag = 'scoped memory for tpu_custom_call.1']
    #allocation10 [shape = 'u8[65536]{0}', space=vmem, size = 0x10000, scoped, tag = 'input window, operand 2, single buffered']
    #allocation11 [shape = 'u8[65536]{0}', space=vmem, size = 0x10000, scoped, tag = 'input window, operand 4, single buffered']
    #allocation12 [shape = 's32[1]{0}', space=sflag, size = 0x4, scoped, tag = 'scoped memory for tpu_custom_call.1']
    #allocation13 [shape = 'u8[65536]{0}', space=vmem, size = 0x10000, scoped, tag = 'input window, operand 6, single buffered']
    #allocation14 [shape = 'u8[4096]{0}', space=vmem, size = 0x1000, scoped, tag = 'output window, operand 0, single buffered']
    #allocation15 [shape = 'u8[4096]{0}', space=vmem, size = 0x1000, scoped, tag = 'output window, operand 1, single buffered']
    #allocation16 [shape = 's32[1]{0}', space=sflag, size = 0x4, scoped, tag = 'scoped memory for tpu_custom_call.1']
    %15 = vsyncpa [#allocation6], 0
    %16 = vsyncpa [#allocation9], 0
    %17 = vsyncpa [#allocation12], 0
    %18 = vsyncpa [#allocation7], 0
    %19 = vsyncpa [#allocation16], 0
    // Predicated region
    $region2: #{tpu_custom_call.1} parent=1 // pred_check
      _
    $region3: #{tpu_custom_call.1} parent=1 // pred_check_branch
      %21 = sbr.rel (0) target = $region5
    $region4: #{tpu_custom_call.1} parent=1 // pred_region
      %s23 = ssub.s32 1024, 1024
      %24 = vsyncadd [#allocation6], %s23
      %s25 = sshll.u32 [#allocation5], 4
      %s26 = int_to_ptr.vmem [resolvable:$true] %s25
      %31 = dma.hbm_to_vmem [thread:$0]  %s0, 1024, %s26, [#allocation6], 128, 128, 8
    $region5: #{tpu_custom_call.1} parent=1 // pred_fallthru
      _
    // Predicated region
    $region6: #{tpu_custom_call.1} parent=1 // pred_check
      _
    $region7: #{tpu_custom_call.1} parent=1 // pred_check_branch
      %33 = sbr.rel (0) target = $region9
    $region8: #{tpu_custom_call.1} parent=1 // pred_region
      %s35 = ssub.s32 2048, 2048
      %36 = vsyncadd [#allocation9], %s35
      %s37 = sshll.u32 [#allocation8], 4
      %s38 = int_to_ptr.vmem [resolvable:$true] %s37
      %43 = dma.hbm_to_vmem [thread:$0]  %s1, 2048, %s38, [#allocation9], 128, 128, 8
    $region9: #{tpu_custom_call.1} parent=1 // pred_fallthru
      _
    // Predicated region
    $region10: #{tpu_custom_call.1} parent=1 // pred_check
      _
    $region11: #{tpu_custom_call.1} parent=1 // pred_check_branch
      %45 = sbr.rel (0) target = $region13
    $region12: #{tpu_custom_call.1} parent=1 // pred_region
      %s47 = ssub.s32 2048, 2048
      %48 = vsyncadd [#allocation9], %s47
      %s49 = sshll.u32 [#allocation10], 4
      %s50 = int_to_ptr.vmem [resolvable:$true] %s49
      %55 = dma.hbm_to_vmem [thread:$0]  %s2, 2048, %s50, [#allocation9], 128, 128, 8
    $region13: #{tpu_custom_call.1} parent=1 // pred_fallthru
      _
    // Predicated region
    $region14: #{tpu_custom_call.1} parent=1 // pred_check
      _
    $region15: #{tpu_custom_call.1} parent=1 // pred_check_branch
      %57 = sbr.rel (0) target = $region17
    $region16: #{tpu_custom_call.1} parent=1 // pred_region
      _
    $region17: #{tpu_custom_call.1} parent=1 // pred_fallthru
      _
    // Predicated region
    $region18: #{tpu_custom_call.1} parent=1 // pred_check
      _
    $region19: #{tpu_custom_call.1} parent=1 // pred_check_branch
      %59 = sbr.rel (0) target = $region21
    $region20: #{tpu_custom_call.1} parent=1 // pred_region
      %s61 = ssub.s32 2048, 2048
      %62 = vsyncadd [#allocation12], %s61
      %s63 = sshll.u32 [#allocation11], 4
      %s64 = int_to_ptr.vmem [resolvable:$true] %s63
      %69 = dma.hbm_to_vmem [thread:$0]  %s4, 2048, %s64, [#allocation12], 128, 128, 8
    $region21: #{tpu_custom_call.1} parent=1 // pred_fallthru
      _
    // Predicated region
    $region22: #{tpu_custom_call.1} parent=1 // pred_check
      _
    $region23: #{tpu_custom_call.1} parent=1 // pred_check_branch
      %71 = sbr.rel (0) target = $region25
    $region24: #{tpu_custom_call.1} parent=1 // pred_region
      _
    $region25: #{tpu_custom_call.1} parent=1 // pred_fallthru
      _
    // Predicated region
    $region26: #{tpu_custom_call.1} parent=1 // pred_check
      _
    $region27: #{tpu_custom_call.1} parent=1 // pred_check_branch
      %73 = sbr.rel (0) target = $region29
    $region28: #{tpu_custom_call.1} parent=1 // pred_region
      %s75 = ssub.s32 2048, 2048
      %76 = vsyncadd [#allocation12], %s75
      %s77 = sshll.u32 [#allocation13], 4
      %s78 = int_to_ptr.vmem [resolvable:$true] %s77
      %83 = dma.hbm_to_vmem [thread:$0]  %s6, 2048, %s78, [#allocation12], 128, 128, 8
    $region29: #{tpu_custom_call.1} parent=1 // pred_fallthru
      _
    // Predicated region
    $region30: #{tpu_custom_call.1} parent=1 // pred_check
      _
    $region31: #{tpu_custom_call.1} parent=1 // pred_check_branch
      %85 = sbr.rel (0) target = $region33
    $region32: #{tpu_custom_call.1} parent=1 // pred_region
      _
    $region33: #{tpu_custom_call.1} parent=1 // pred_fallthru
      _
    // Predicated region
    $region34: #{tpu_custom_call.1} parent=1 // pred_check
      _
    $region35: #{tpu_custom_call.1} parent=1 // pred_check_branch
      %87 = sbr.rel (0) target = $region37
    $region36: #{tpu_custom_call.1} parent=1 // pred_region
      %88 = dma.done [#allocation6], 1024
    $region37: #{tpu_custom_call.1} parent=1 // pred_fallthru
      _
    // Predicated region
    $region38: #{tpu_custom_call.1} parent=1 // pred_check
      _
    $region39: #{tpu_custom_call.1} parent=1 // pred_check_branch
      %90 = sbr.rel (0) target = $region41
    $region40: #{tpu_custom_call.1} parent=1 // pred_region
      %91 = dma.done [#allocation9], 2048
    $region41: #{tpu_custom_call.1} parent=1 // pred_fallthru
      _
    // Predicated region
    $region42: #{tpu_custom_call.1} parent=1 // pred_check
      _
    $region43: #{tpu_custom_call.1} parent=1 // pred_check_branch
      %93 = sbr.rel (0) target = $region45
    $region44: #{tpu_custom_call.1} parent=1 // pred_region
      %94 = dma.done [#allocation9], 2048
    $region45: #{tpu_custom_call.1} parent=1 // pred_fallthru
      _
    // Predicated region
    $region46: #{tpu_custom_call.1} parent=1 // pred_check
      _
    $region47: #{tpu_custom_call.1} parent=1 // pred_check_branch
      %96 = sbr.rel (0) target = $region49
    $region48: #{tpu_custom_call.1} parent=1 // pred_region
      %97 = dma.done [#allocation12], 2048
    $region49: #{tpu_custom_call.1} parent=1 // pred_fallthru
      _
    // Predicated region
    $region50: #{tpu_custom_call.1} parent=1 // pred_check
      _
    $region51: #{tpu_custom_call.1} parent=1 // pred_check_branch
      %99 = sbr.rel (0) target = $region53
    $region52: #{tpu_custom_call.1} parent=1 // pred_region
      %100 = dma.done [#allocation12], 2048
    $region53: #{tpu_custom_call.1} parent=1 // pred_fallthru
      _
    %p101 = scmp.eq.s32.totalorder 0, 0
    // Predicated region
    $region54: #{tpu_custom_call.1} parent=1 // pred_check
      %p102 = pneg %p101
    $region55: #{tpu_custom_call.1} parent=1 // pred_check_branch
      %104 = sbr.rel (%p102) target = $region57
    $region56: #{tpu_custom_call.1} parent=1 // pred_region
      %105 = vst [vmem:[#allocation2] sm:$0xff] 0.0
      %106 = vst [vmem:[#allocation3] sm:$0xff] 0.0
    $region57: #{tpu_custom_call.1} parent=1 // pred_fallthru
      _
    %v107 = vld [vmem:[#allocation8] sm:$0xff]
    %v108 = vld [vmem:[#allocation8 + $0x8] sm:$0xff]
    %v109 = vld [vmem:[#allocation8 + $0x10] sm:$0xff]
    %v110 = vld [vmem:[#allocation8 + $0x18] sm:$0xff]
    %v111 = vld [vmem:[#allocation8 + $0x20] sm:$0xff]
    %v112 = vld [vmem:[#allocation8 + $0x28] sm:$0xff]
    %v113 = vld [vmem:[#allocation8 + $0x30] sm:$0xff]
    %v114 = vld [vmem:[#allocation8 + $0x38] sm:$0xff]
    %v115 = vld [vmem:[#allocation8 + $0x40] sm:$0xff]
    %v116 = vld [vmem:[#allocation8 + $0x48] sm:$0xff]
    %v117 = vld [vmem:[#allocation8 + $0x50] sm:$0xff]
    %v118 = vld [vmem:[#allocation8 + $0x58] sm:$0xff]
    %v119 = vld [vmem:[#allocation8 + $0x60] sm:$0xff]
    %v120 = vld [vmem:[#allocation8 + $0x68] sm:$0xff]
    %v121 = vld [vmem:[#allocation8 + $0x70] sm:$0xff]
    %v122 = vld [vmem:[#allocation8 + $0x78] sm:$0xff]
    %s123 = smul.u32 0, 8
    %s124 = scalar_lea.vmem [#allocation5], %s123
    %v125 = vld [vmem:[%s124] sm:$0xff]
    %v126 = vld [vmem:[%s124 + $0x8] sm:$0xff]
    %v127 = vld [vmem:[%s124 + $0x10] sm:$0xff]
    %v128 = vld [vmem:[%s124 + $0x18] sm:$0xff]
    %v129 = vld [vmem:[%s124 + $0x20] sm:$0xff]
    %v130 = vld [vmem:[%s124 + $0x28] sm:$0xff]
    %v131 = vld [vmem:[%s124 + $0x30] sm:$0xff]
    %v132 = vld [vmem:[%s124 + $0x38] sm:$0xff]
    %133 = vmatprep.subr.mxu0 0.0
    %134 = vmatpush1.msra.mxu0 %v107
    %135 = vmatprep.subr.mxu0 0.0
    %136 = vmatpush1.msra.mxu0 %v108
    %137 = vmatprep.subr.mxu0 0.0
    %138 = vmatpush1.msra.mxu0 %v109
    %139 = vmatprep.subr.mxu0 0.0
    %140 = vmatpush1.msra.mxu0 %v110
    %141 = vmatprep.subr.mxu0 0.0
    %142 = vmatpush1.msra.mxu0 %v111
    %143 = vmatprep.subr.mxu0 0.0
    %144 = vmatpush1.msra.mxu0 %v112
    %145 = vmatprep.subr.mxu0 0.0
    %146 = vmatpush1.msra.mxu0 %v113
    %147 = vmatprep.subr.mxu0 0.0
    %148 = vmatpush1.msra.mxu0 %v114
    %149 = vmatprep.subr.mxu0 0.0
    %150 = vmatpush1.msra.mxu0 %v115
    %151 = vmatprep.subr.mxu0 0.0
    %152 = vmatpush1.msra.mxu0 %v116
    %153 = vmatprep.subr.mxu0 0.0
    %154 = vmatpush1.msra.mxu0 %v117
    %155 = vmatprep.subr.mxu0 0.0
    %156 = vmatpush1.msra.mxu0 %v118
    %157 = vmatprep.subr.mxu0 0.0
    %158 = vmatpush1.msra.mxu0 %v119
    %159 = vmatprep.subr.mxu0 0.0
    %160 = vmatpush1.msra.mxu0 %v120
    %161 = vmatprep.subr.mxu0 0.0
    %162 = vmatpush1.msra.mxu0 %v121
    %163 = vmatprep.subr.mxu0 0.0
    %164 = vmatpush1.msra.mxu0 %v122
    %165 = vmatprep.subr.mxu0 0.0
    %166 = vmatpush1.msra.mxu0 0.0
    %167 = vmatprep.subr.mxu0 0.0
    %168 = vmatpush1.msra.mxu0 0.0
    %169 = vmatprep.subr.mxu0 0.0
    %170 = vmatpush1.msra.mxu0 0.0
    %171 = vmatprep.subr.mxu0 0.0
    %172 = vmatpush1.msra.mxu0 0.0
    %173 = vmatprep.subr.mxu0 0.0
    %174 = vmatpush1.msra.mxu0 0.0
    %175 = vmatprep.subr.mxu0 0.0
    %176 = vmatpush1.msra.mxu0 0.0
    %177 = vmatprep.subr.mxu0 0.0
    %178 = vmatpush1.msra.mxu0 0.0
    %179 = vmatprep.subr.mxu0 0.0
    %180 = vmatpush1.msra.mxu0 0.0
    %181 = vmatprep.subr.mxu0 0.0
    %182 = vmatpush1.msra.mxu0 0.0
    %183 = vmatprep.subr.mxu0 0.0
    %184 = vmatpush1.msra.mxu0 0.0
    %185 = vmatprep.subr.mxu0 0.0
    %186 = vmatpush1.msra.mxu0 0.0
    %187 = vmatprep.subr.mxu0 0.0
    %188 = vmatpush1.msra.mxu0 0.0
    %189 = vmatprep.subr.mxu0 0.0
    %190 = vmatpush1.msra.mxu0 0.0
    %191 = vmatprep.subr.mxu0 0.0
    %192 = vmatpush1.msra.mxu0 0.0
    %193 = vmatprep.subr.mxu0 0.0
    %194 = vmatpush1.msra.mxu0 0.0
    %195 = vmatprep.subr.mxu0 0.0
    %196 = vmatpush1.msra.mxu0 0.0
    %197 = vmatprep.mubr.f32.mxu0 0.0
    %198 = vmatmul.mubr.f32.gmra.mrb[0].mxu0 %v125
    %v199 = vpop.f32.mrb[0].mxu0
    %v200 = vadd.f32 0.0, %v199
    %v201 = vpop.f32.mrb[0].mxu0
    %202 = vmatprep.mubr.f32.mxu0 0.0
    %203 = vmatmul.mubr.f32.gmra.mrb[0].mxu0 %v126
    %v204 = vpop.f32.mrb[0].mxu0
    %v205 = vadd.f32 0.0, %v204
    %v206 = vpop.f32.mrb[0].mxu0
    %207 = vmatprep.mubr.f32.mxu0 0.0
    %208 = vmatmul.mubr.f32.gmra.mrb[0].mxu0 %v127
    %v209 = vpop.f32.mrb[0].mxu0
    %v210 = vadd.f32 0.0, %v209
    %v211 = vpop.f32.mrb[0].mxu0
    %212 = vmatprep.mubr.f32.mxu0 0.0
    %213 = vmatmul.mubr.f32.gmra.mrb[0].mxu0 %v128
    %v214 = vpop.f32.mrb[0].mxu0
    %v215 = vadd.f32 0.0, %v214
    %v216 = vpop.f32.mrb[0].mxu0
    %217 = vmatprep.mubr.f32.mxu0 0.0
    %218 = vmatmul.mubr.f32.gmra.mrb[0].mxu0 %v129
    %v219 = vpop.f32.mrb[0].mxu0
    %v220 = vadd.f32 0.0, %v219
    %v221 = vpop.f32.mrb[0].mxu0
    %222 = vmatprep.mubr.f32.mxu0 0.0
    %223 = vmatmul.mubr.f32.gmra.mrb[0].mxu0 %v130
    %v224 = vpop.f32.mrb[0].mxu0
    %v225 = vadd.f32 0.0, %v224
    %v226 = vpop.f32.mrb[0].mxu0
    %227 = vmatprep.mubr.f32.mxu0 0.0
    %228 = vmatmul.mubr.f32.gmra.mrb[0].mxu0 %v131
    %v229 = vpop.f32.mrb[0].mxu0
    %v230 = vadd.f32 0.0, %v229
    %v231 = vpop.f32.mrb[0].mxu0
    %232 = vmatprep.mubr.f32.mxu0 0.0
    %233 = vmatmul.mubr.f32.gmra.mrb[0].mxu0 %v132
    %v234 = vpop.f32.mrb[0].mxu0
    %v235 = vadd.f32 0.0, %v234
    %v236 = vpop.f32.mrb[0].mxu0
    %237 = vdwg.mxu0
    %s238 = scalar_lea.vmem [#allocation4], %s123
    %239 = vst [vmem:[%s238] sm:$0xff] %v200
    %240 = vst [vmem:[%s238 + $0x8] sm:$0xff] %v205
    %241 = vst [vmem:[%s238 + $0x10] sm:$0xff] %v210
    %242 = vst [vmem:[%s238 + $0x18] sm:$0xff] %v215
    %243 = vst [vmem:[%s238 + $0x20] sm:$0xff] %v220
    %244 = vst [vmem:[%s238 + $0x28] sm:$0xff] %v225
    %245 = vst [vmem:[%s238 + $0x30] sm:$0xff] %v230
    %246 = vst [vmem:[%s238 + $0x38] sm:$0xff] %v235
    %v247 = vld [vmem:[#allocation10] sm:$0xff]
    %v248 = vld [vmem:[#allocation10 + $0x8] sm:$0xff]
    %v249 = vld [vmem:[#allocation10 + $0x10] sm:$0xff]
    %v250 = vld [vmem:[#allocation10 + $0x18] sm:$0xff]
    %v251 = vld [vmem:[#allocation10 + $0x20] sm:$0xff]
    %v252 = vld [vmem:[#allocation10 + $0x28] sm:$0xff]
    %v253 = vld [vmem:[#allocation10 + $0x30] sm:$0xff]
    %v254 = vld [vmem:[#allocation10 + $0x38] sm:$0xff]
    %v255 = vld [vmem:[#allocation10 + $0x40] sm:$0xff]
    %v256 = vld [vmem:[#allocation10 + $0x48] sm:$0xff]
    %v257 = vld [vmem:[#allocation10 + $0x50] sm:$0xff]
    %v258 = vld [vmem:[#allocation10 + $0x58] sm:$0xff]
    %v259 = vld [vmem:[#allocation10 + $0x60] sm:$0xff]
    %v260 = vld [vmem:[#allocation10 + $0x68] sm:$0xff]
    %v261 = vld [vmem:[#allocation10 + $0x70] sm:$0xff]
    %v262 = vld [vmem:[#allocation10 + $0x78] sm:$0xff]
    %v263 = vld [vmem:[%s3] sm:$0x1]
    %v264 = vld [vmem:[#allocation2] sm:$0xff]
    %265 = vmatprep.subr.mxu0 0.0
    %266 = vmatpush1.msra.mxu0 %v247
    %267 = vmatprep.subr.mxu0 0.0
    %268 = vmatpush1.msra.mxu0 %v248
    %269 = vmatprep.subr.mxu0 0.0
    %270 = vmatpush1.msra.mxu0 %v249
    %271 = vmatprep.subr.mxu0 0.0
    %272 = vmatpush1.msra.mxu0 %v250
    %273 = vmatprep.subr.mxu0 0.0
    %274 = vmatpush1.msra.mxu0 %v251
    %275 = vmatprep.subr.mxu0 0.0
    %276 = vmatpush1.msra.mxu0 %v252
    %277 = vmatprep.subr.mxu0 0.0
    %278 = vmatpush1.msra.mxu0 %v253
    %279 = vmatprep.subr.mxu0 0.0
    %280 = vmatpush1.msra.mxu0 %v254
    %281 = vmatprep.subr.mxu0 0.0
    %282 = vmatpush1.msra.mxu0 %v255
    %283 = vmatprep.subr.mxu0 0.0
    %284 = vmatpush1.msra.mxu0 %v256
    %285 = vmatprep.subr.mxu0 0.0
    %286 = vmatpush1.msra.mxu0 %v257
    %287 = vmatprep.subr.mxu0 0.0
    %288 = vmatpush1.msra.mxu0 %v258
    %289 = vmatprep.subr.mxu0 0.0
    %290 = vmatpush1.msra.mxu0 %v259
    %291 = vmatprep.subr.mxu0 0.0
    %292 = vmatpush1.msra.mxu0 %v260
    %293 = vmatprep.subr.mxu0 0.0
    %294 = vmatpush1.msra.mxu0 %v261
    %295 = vmatprep.subr.mxu0 0.0
    %296 = vmatpush1.msra.mxu0 %v262
    %297 = vmatprep.subr.mxu0 0.0
    %298 = vmatpush1.msra.mxu0 0.0
    %299 = vmatprep.subr.mxu0 0.0
    %300 = vmatpush1.msra.mxu0 0.0
    %301 = vmatprep.subr.mxu0 0.0
    %302 = vmatpush1.msra.mxu0 0.0
    %303 = vmatprep.subr.mxu0 0.0
    %304 = vmatpush1.msra.mxu0 0.0
    %305 = vmatprep.subr.mxu0 0.0
    %306 = vmatpush1.msra.mxu0 0.0
    %307 = vmatprep.subr.mxu0 0.0
    %308 = vmatpush1.msra.mxu0 0.0
    %309 = vmatprep.subr.mxu0 0.0
    %310 = vmatpush1.msra.mxu0 0.0
    %311 = vmatprep.subr.mxu0 0.0
    %312 = vmatpush1.msra.mxu0 0.0
    %313 = vmatprep.subr.mxu0 0.0
    %314 = vmatpush1.msra.mxu0 0.0
    %315 = vmatprep.subr.mxu0 0.0
    %316 = vmatpush1.msra.mxu0 0.0
    %317 = vmatprep.subr.mxu0 0.0
    %318 = vmatpush1.msra.mxu0 0.0
    %319 = vmatprep.subr.mxu0 0.0
    %320 = vmatpush1.msra.mxu0 0.0
    %321 = vmatprep.subr.mxu0 0.0
    %322 = vmatpush1.msra.mxu0 0.0
    %323 = vmatprep.subr.mxu0 0.0
    %324 = vmatpush1.msra.mxu0 0.0
    %325 = vmatprep.subr.mxu0 0.0
    %326 = vmatpush1.msra.mxu0 0.0
    %327 = vmatprep.subr.mxu0 0.0
    %328 = vmatpush1.msra.mxu0 0.0
    %329 = vmatprep.mubr.f32.mxu0 0.0
    %330 = vmatmul.mubr.f32.gmra.mrb[0].mxu0 %v264
    %v331 = vpop.f32.mrb[0].mxu0
    %v332 = vadd.f32 0.0, %v331
    %v333 = vpop.f32.mrb[0].mxu0
    %334 = vdwg.mxu0
    %v335 = vld [vmem:[#allocation4] sm:$0xff]
    %v337 = vlaneseq
    %v338 = vshrl.u32 %v337, 7
    %v339 = vsub.s32 0, %v338
    %v340 = vrot.slane %v263, %v339
    %v342 = vadd.f32 %v335, %v340
    %v343 = vadd.f32 %v342, %v332
    %v344 = vxor.u32 %v343, 2147483648
    %v345 = vmul.f32 %v344, 1.442695
    %v346 = vpow.pop %v345
    %v347 = vadd.f32 %v346, 1.0
    %v348 = vrcp.pop %v347
    %v349 = vmul.f32 1.0, %v348
    %350 = vst [vmem:[#allocation4] sm:$0xff] %v349
    %351 = vmatprep.subr.mxu0 0.0
    %352 = vmatpush1.msra.mxu0 %v247
    %353 = vmatprep.subr.mxu0 0.0
    %354 = vmatpush1.msra.mxu0 %v248
    %355 = vmatprep.subr.mxu0 0.0
    %356 = vmatpush1.msra.mxu0 %v249
    %357 = vmatprep.subr.mxu0 0.0
    %358 = vmatpush1.msra.mxu0 %v250
    %359 = vmatprep.subr.mxu0 0.0
    %360 = vmatpush1.msra.mxu0 %v251
    %361 = vmatprep.subr.mxu0 0.0
    %362 = vmatpush1.msra.mxu0 %v252
    %363 = vmatprep.subr.mxu0 0.0
    %364 = vmatpush1.msra.mxu0 %v253
    %365 = vmatprep.subr.mxu0 0.0
    %366 = vmatpush1.msra.mxu0 %v254
    %367 = vmatprep.subr.mxu0 0.0
    %368 = vmatpush1.msra.mxu0 %v255
    %369 = vmatprep.subr.mxu0 0.0
    %370 = vmatpush1.msra.mxu0 %v256
    %371 = vmatprep.subr.mxu0 0.0
    %372 = vmatpush1.msra.mxu0 %v257
    %373 = vmatprep.subr.mxu0 0.0
    %374 = vmatpush1.msra.mxu0 %v258
    %375 = vmatprep.subr.mxu0 0.0
    %376 = vmatpush1.msra.mxu0 %v259
    %377 = vmatprep.subr.mxu0 0.0
    %378 = vmatpush1.msra.mxu0 %v260
    %379 = vmatprep.subr.mxu0 0.0
    %380 = vmatpush1.msra.mxu0 %v261
    %381 = vmatprep.subr.mxu0 0.0
    %382 = vmatpush1.msra.mxu0 %v262
    %383 = vmatprep.subr.mxu0 0.0
    %384 = vmatpush1.msra.mxu0 0.0
    %385 = vmatprep.subr.mxu0 0.0
    %386 = vmatpush1.msra.mxu0 0.0
    %387 = vmatprep.subr.mxu0 0.0
    %388 = vmatpush1.msra.mxu0 0.0
    %389 = vmatprep.subr.mxu0 0.0
    %390 = vmatpush1.msra.mxu0 0.0
    %391 = vmatprep.subr.mxu0 0.0
    %392 = vmatpush1.msra.mxu0 0.0
    %393 = vmatprep.subr.mxu0 0.0
    %394 = vmatpush1.msra.mxu0 0.0
    %395 = vmatprep.subr.mxu0 0.0
    %396 = vmatpush1.msra.mxu0 0.0
    %397 = vmatprep.subr.mxu0 0.0
    %398 = vmatpush1.msra.mxu0 0.0
    %399 = vmatprep.subr.mxu0 0.0
    %400 = vmatpush1.msra.mxu0 0.0
    %401 = vmatprep.subr.mxu0 0.0
    %402 = vmatpush1.msra.mxu0 0.0
    %403 = vmatprep.subr.mxu0 0.0
    %404 = vmatpush1.msra.mxu0 0.0
    %405 = vmatprep.subr.mxu0 0.0
    %406 = vmatpush1.msra.mxu0 0.0
    %407 = vmatprep.subr.mxu0 0.0
    %408 = vmatpush1.msra.mxu0 0.0
    %409 = vmatprep.subr.mxu0 0.0
    %410 = vmatpush1.msra.mxu0 0.0
    %411 = vmatprep.subr.mxu0 0.0
    %412 = vmatpush1.msra.mxu0 0.0
    %413 = vmatprep.subr.mxu0 0.0
    %414 = vmatpush1.msra.mxu0 0.0
    %415 = vmatprep.mubr.f32.mxu0 0.0
    %416 = vmatmul.mubr.f32.gmra.mrb[0].mxu0 %v349
    %v417 = vpop.f32.mrb[0].mxu0
    %v418 = vadd.f32 0.0, %v417
    %v419 = vpop.f32.mrb[0].mxu0
    %420 = vdwg.mxu0
    %s421 = scalar_lea.vmem [#allocation4], 8
    %v422 = vld [vmem:[%s421] sm:$0xff]
    %v423 = vadd.f32 %v422, %v340
    %v424 = vadd.f32 %v423, %v418
    %v425 = vxor.u32 %v424, 2147483648
    %v426 = vmul.f32 %v425, 1.442695
    %v427 = vpow.pop %v426
    %v428 = vadd.f32 %v427, 1.0
    %v429 = vrcp.pop %v428
    %v430 = vmul.f32 1.0, %v429
    %431 = vst [vmem:[%s421] sm:$0xff] %v430
    %432 = vmatprep.subr.mxu0 0.0
    %433 = vmatpush1.msra.mxu0 %v247
    %434 = vmatprep.subr.mxu0 0.0
    %435 = vmatpush1.msra.mxu0 %v248
    %436 = vmatprep.subr.mxu0 0.0
    %437 = vmatpush1.msra.mxu0 %v249
    %438 = vmatprep.subr.mxu0 0.0
    %439 = vmatpush1.msra.mxu0 %v250
    %440 = vmatprep.subr.mxu0 0.0
    %441 = vmatpush1.msra.mxu0 %v251
    %442 = vmatprep.subr.mxu0 0.0
    %443 = vmatpush1.msra.mxu0 %v252
    %444 = vmatprep.subr.mxu0 0.0
    %445 = vmatpush1.msra.mxu0 %v253
    %446 = vmatprep.subr.mxu0 0.0
    %447 = vmatpush1.msra.mxu0 %v254
    %448 = vmatprep.subr.mxu0 0.0
    %449 = vmatpush1.msra.mxu0 %v255
    %450 = vmatprep.subr.mxu0 0.0
    %451 = vmatpush1.msra.mxu0 %v256
    %452 = vmatprep.subr.mxu0 0.0
    %453 = vmatpush1.msra.mxu0 %v257
    %454 = vmatprep.subr.mxu0 0.0
    %455 = vmatpush1.msra.mxu0 %v258
    %456 = vmatprep.subr.mxu0 0.0
    %457 = vmatpush1.msra.mxu0 %v259
    %458 = vmatprep.subr.mxu0 0.0
    %459 = vmatpush1.msra.mxu0 %v260
    %460 = vmatprep.subr.mxu0 0.0
    %461 = vmatpush1.msra.mxu0 %v261
    %462 = vmatprep.subr.mxu0 0.0
    %463 = vmatpush1.msra.mxu0 %v262
    %464 = vmatprep.subr.mxu0 0.0
    %465 = vmatpush1.msra.mxu0 0.0
    %466 = vmatprep.subr.mxu0 0.0
    %467 = vmatpush1.msra.mxu0 0.0
    %468 = vmatprep.subr.mxu0 0.0
    %469 = vmatpush1.msra.mxu0 0.0
    %470 = vmatprep.subr.mxu0 0.0
    %471 = vmatpush1.msra.mxu0 0.0
    %472 = vmatprep.subr.mxu0 0.0
    %473 = vmatpush1.msra.mxu0 0.0
    %474 = vmatprep.subr.mxu0 0.0
    %475 = vmatpush1.msra.mxu0 0.0
    %476 = vmatprep.subr.mxu0 0.0
    %477 = vmatpush1.msra.mxu0 0.0
    %478 = vmatprep.subr.mxu0 0.0
    %479 = vmatpush1.msra.mxu0 0.0
    %480 = vmatprep.subr.mxu0 0.0
    %481 = vmatpush1.msra.mxu0 0.0
    %482 = vmatprep.subr.mxu0 0.0
    %483 = vmatpush1.msra.mxu0 0.0
    %484 = vmatprep.subr.mxu0 0.0
    %485 = vmatpush1.msra.mxu0 0.0
    %486 = vmatprep.subr.mxu0 0.0
    %487 = vmatpush1.msra.mxu0 0.0
    %488 = vmatprep.subr.mxu0 0.0
    %489 = vmatpush1.msra.mxu0 0.0
    %490 = vmatprep.subr.mxu0 0.0
    %491 = vmatpush1.msra.mxu0 0.0
    %492 = vmatprep.subr.mxu0 0.0
    %493 = vmatpush1.msra.mxu0 0.0
    %494 = vmatprep.subr.mxu0 0.0
    %495 = vmatpush1.msra.mxu0 0.0
    %496 = vmatprep.mubr.f32.mxu0 0.0
    %497 = vmatmul.mubr.f32.gmra.mrb[0].mxu0 %v430
    %v498 = vpop.f32.mrb[0].mxu0
    %v499 = vadd.f32 0.0, %v498
    %v500 = vpop.f32.mrb[0].mxu0
    %501 = vdwg.mxu0
    %s502 = scalar_lea.vmem [#allocation4], 16
    %v503 = vld [vmem:[%s502] sm:$0xff]
    %v504 = vadd.f32 %v503, %v340
    %v505 = vadd.f32 %v504, %v499
    %v506 = vxor.u32 %v505, 2147483648
    %v507 = vmul.f32 %v506, 1.442695
    %v508 = vpow.pop %v507
    %v509 = vadd.f32 %v508, 1.0
    %v510 = vrcp.pop %v509
    %v511 = vmul.f32 1.0, %v510
    %512 = vst [vmem:[%s502] sm:$0xff] %v511
    %513 = vmatprep.subr.mxu0 0.0
    %514 = vmatpush1.msra.mxu0 %v247
    %515 = vmatprep.subr.mxu0 0.0
    %516 = vmatpush1.msra.mxu0 %v248
    %517 = vmatprep.subr.mxu0 0.0
    %518 = vmatpush1.msra.mxu0 %v249
    %519 = vmatprep.subr.mxu0 0.0
    %520 = vmatpush1.msra.mxu0 %v250
    %521 = vmatprep.subr.mxu0 0.0
    %522 = vmatpush1.msra.mxu0 %v251
    %523 = vmatprep.subr.mxu0 0.0
    %524 = vmatpush1.msra.mxu0 %v252
    %525 = vmatprep.subr.mxu0 0.0
    %526 = vmatpush1.msra.mxu0 %v253
    %527 = vmatprep.subr.mxu0 0.0
    %528 = vmatpush1.msra.mxu0 %v254
    %529 = vmatprep.subr.mxu0 0.0
    %530 = vmatpush1.msra.mxu0 %v255
    %531 = vmatprep.subr.mxu0 0.0
    %532 = vmatpush1.msra.mxu0 %v256
    %533 = vmatprep.subr.mxu0 0.0
    %534 = vmatpush1.msra.mxu0 %v257
    %535 = vmatprep.subr.mxu0 0.0
    %536 = vmatpush1.msra.mxu0 %v258
    %537 = vmatprep.subr.mxu0 0.0
    %538 = vmatpush1.msra.mxu0 %v259
    %539 = vmatprep.subr.mxu0 0.0
    %540 = vmatpush1.msra.mxu0 %v260
    %541 = vmatprep.subr.mxu0 0.0
    %542 = vmatpush1.msra.mxu0 %v261
    %543 = vmatprep.subr.mxu0 0.0
    %544 = vmatpush1.msra.mxu0 %v262
    %545 = vmatprep.subr.mxu0 0.0
    %546 = vmatpush1.msra.mxu0 0.0
    %547 = vmatprep.subr.mxu0 0.0
    %548 = vmatpush1.msra.mxu0 0.0
    %549 = vmatprep.subr.mxu0 0.0
    %550 = vmatpush1.msra.mxu0 0.0
    %551 = vmatprep.subr.mxu0 0.0
    %552 = vmatpush1.msra.mxu0 0.0
    %553 = vmatprep.subr.mxu0 0.0
    %554 = vmatpush1.msra.mxu0 0.0
    %555 = vmatprep.subr.mxu0 0.0
    %556 = vmatpush1.msra.mxu0 0.0
    %557 = vmatprep.subr.mxu0 0.0
    %558 = vmatpush1.msra.mxu0 0.0
    %559 = vmatprep.subr.mxu0 0.0
    %560 = vmatpush1.msra.mxu0 0.0
    %561 = vmatprep.subr.mxu0 0.0
    %562 = vmatpush1.msra.mxu0 0.0
    %563 = vmatprep.subr.mxu0 0.0
    %564 = vmatpush1.msra.mxu0 0.0
    %565 = vmatprep.subr.mxu0 0.0
    %566 = vmatpush1.msra.mxu0 0.0
    %567 = vmatprep.subr.mxu0 0.0
    %568 = vmatpush1.msra.mxu0 0.0
    %569 = vmatprep.subr.mxu0 0.0
    %570 = vmatpush1.msra.mxu0 0.0
    %571 = vmatprep.subr.mxu0 0.0
    %572 = vmatpush1.msra.mxu0 0.0
    %573 = vmatprep.subr.mxu0 0.0
    %574 = vmatpush1.msra.mxu0 0.0
    %575 = vmatprep.subr.mxu0 0.0
    %576 = vmatpush1.msra.mxu0 0.0
    %577 = vmatprep.mubr.f32.mxu0 0.0
    %578 = vmatmul.mubr.f32.gmra.mrb[0].mxu0 %v511
    %v579 = vpop.f32.mrb[0].mxu0
    %v580 = vadd.f32 0.0, %v579
    %v581 = vpop.f32.mrb[0].mxu0
    %582 = vdwg.mxu0
    %s583 = scalar_lea.vmem [#allocation4], 24
    %v584 = vld [vmem:[%s583] sm:$0xff]
    %v585 = vadd.f32 %v584, %v340
    %v586 = vadd.f32 %v585, %v580
    %v587 = vxor.u32 %v586, 2147483648
    %v588 = vmul.f32 %v587, 1.442695
    %v589 = vpow.pop %v588
    %v590 = vadd.f32 %v589, 1.0
    %v591 = vrcp.pop %v590
    %v592 = vmul.f32 1.0, %v591
    %593 = vst [vmem:[%s583] sm:$0xff] %v592
    %594 = vmatprep.subr.mxu0 0.0
    %595 = vmatpush1.msra.mxu0 %v247
    %596 = vmatprep.subr.mxu0 0.0
    %597 = vmatpush1.msra.mxu0 %v248
    %598 = vmatprep.subr.mxu0 0.0
    %599 = vmatpush1.msra.mxu0 %v249
    %600 = vmatprep.subr.mxu0 0.0
    %601 = vmatpush1.msra.mxu0 %v250
    %602 = vmatprep.subr.mxu0 0.0
    %603 = vmatpush1.msra.mxu0 %v251
    %604 = vmatprep.subr.mxu0 0.0
    %605 = vmatpush1.msra.mxu0 %v252
    %606 = vmatprep.subr.mxu0 0.0
    %607 = vmatpush1.msra.mxu0 %v253
    %608 = vmatprep.subr.mxu0 0.0
    %609 = vmatpush1.msra.mxu0 %v254
    %610 = vmatprep.subr.mxu0 0.0
    %611 = vmatpush1.msra.mxu0 %v255
    %612 = vmatprep.subr.mxu0 0.0
    %613 = vmatpush1.msra.mxu0 %v256
    %614 = vmatprep.subr.mxu0 0.0
    %615 = vmatpush1.msra.mxu0 %v257
    %616 = vmatprep.subr.mxu0 0.0
    %617 = vmatpush1.msra.mxu0 %v258
    %618 = vmatprep.subr.mxu0 0.0
    %619 = vmatpush1.msra.mxu0 %v259
    %620 = vmatprep.subr.mxu0 0.0
    %621 = vmatpush1.msra.mxu0 %v260
    %622 = vmatprep.subr.mxu0 0.0
    %623 = vmatpush1.msra.mxu0 %v261
    %624 = vmatprep.subr.mxu0 0.0
    %625 = vmatpush1.msra.mxu0 %v262
    %626 = vmatprep.subr.mxu0 0.0
    %627 = vmatpush1.msra.mxu0 0.0
    %628 = vmatprep.subr.mxu0 0.0
    %629 = vmatpush1.msra.mxu0 0.0
    %630 = vmatprep.subr.mxu0 0.0
    %631 = vmatpush1.msra.mxu0 0.0
    %632 = vmatprep.subr.mxu0 0.0
    %633 = vmatpush1.msra.mxu0 0.0
    %634 = vmatprep.subr.mxu0 0.0
    %635 = vmatpush1.msra.mxu0 0.0
    %636 = vmatprep.subr.mxu0 0.0
    %637 = vmatpush1.msra.mxu0 0.0
    %638 = vmatprep.subr.mxu0 0.0
    %639 = vmatpush1.msra.mxu0 0.0
    %640 = vmatprep.subr.mxu0 0.0
    %641 = vmatpush1.msra.mxu0 0.0
    %642 = vmatprep.subr.mxu0 0.0
    %643 = vmatpush1.msra.mxu0 0.0
    %644 = vmatprep.subr.mxu0 0.0
    %645 = vmatpush1.msra.mxu0 0.0
    %646 = vmatprep.subr.mxu0 0.0
    %647 = vmatpush1.msra.mxu0 0.0
    %648 = vmatprep.subr.mxu0 0.0
    %649 = vmatpush1.msra.mxu0 0.0
    %650 = vmatprep.subr.mxu0 0.0
    %651 = vmatpush1.msra.mxu0 0.0
    %652 = vmatprep.subr.mxu0 0.0
    %653 = vmatpush1.msra.mxu0 0.0
    %654 = vmatprep.subr.mxu0 0.0
    %655 = vmatpush1.msra.mxu0 0.0
    %656 = vmatprep.subr.mxu0 0.0
    %657 = vmatpush1.msra.mxu0 0.0
    %658 = vmatprep.mubr.f32.mxu0 0.0
    %659 = vmatmul.mubr.f32.gmra.mrb[0].mxu0 %v592
    %v660 = vpop.f32.mrb[0].mxu0
    %v661 = vadd.f32 0.0, %v660
    %v662 = vpop.f32.mrb[0].mxu0
    %663 = vdwg.mxu0
    %s664 = scalar_lea.vmem [#allocation4], 32
    %v665 = vld [vmem:[%s664] sm:$0xff]
    %v666 = vadd.f32 %v665, %v340
    %v667 = vadd.f32 %v666, %v661
    %v668 = vxor.u32 %v667, 2147483648
    %v669 = vmul.f32 %v668, 1.442695
    %v670 = vpow.pop %v669
    %v671 = vadd.f32 %v670, 1.0
    %v672 = vrcp.pop %v671
    %v673 = vmul.f32 1.0, %v672
    %674 = vst [vmem:[%s664] sm:$0xff] %v673
    %675 = vmatprep.subr.mxu0 0.0
    %676 = vmatpush1.msra.mxu0 %v247
    %677 = vmatprep.subr.mxu0 0.0
    %678 = vmatpush1.msra.mxu0 %v248
    %679 = vmatprep.subr.mxu0 0.0
    %680 = vmatpush1.msra.mxu0 %v249
    %681 = vmatprep.subr.mxu0 0.0
    %682 = vmatpush1.msra.mxu0 %v250
    %683 = vmatprep.subr.mxu0 0.0
    %684 = vmatpush1.msra.mxu0 %v251
    %685 = vmatprep.subr.mxu0 0.0
    %686 = vmatpush1.msra.mxu0 %v252
    %687 = vmatprep.subr.mxu0 0.0
    %688 = vmatpush1.msra.mxu0 %v253
    %689 = vmatprep.subr.mxu0 0.0
    %690 = vmatpush1.msra.mxu0 %v254
    %691 = vmatprep.subr.mxu0 0.0
    %692 = vmatpush1.msra.mxu0 %v255
    %693 = vmatprep.subr.mxu0 0.0
    %694 = vmatpush1.msra.mxu0 %v256
    %695 = vmatprep.subr.mxu0 0.0
    %696 = vmatpush1.msra.mxu0 %v257
    %697 = vmatprep.subr.mxu0 0.0
    %698 = vmatpush1.msra.mxu0 %v258
    %699 = vmatprep.subr.mxu0 0.0
    %700 = vmatpush1.msra.mxu0 %v259
    %701 = vmatprep.subr.mxu0 0.0
    %702 = vmatpush1.msra.mxu0 %v260
    %703 = vmatprep.subr.mxu0 0.0
    %704 = vmatpush1.msra.mxu0 %v261
    %705 = vmatprep.subr.mxu0 0.0
    %706 = vmatpush1.msra.mxu0 %v262
    %707 = vmatprep.subr.mxu0 0.0
    %708 = vmatpush1.msra.mxu0 0.0
    %709 = vmatprep.subr.mxu0 0.0
    %710 = vmatpush1.msra.mxu0 0.0
    %711 = vmatprep.subr.mxu0 0.0
    %712 = vmatpush1.msra.mxu0 0.0
    %713 = vmatprep.subr.mxu0 0.0
    %714 = vmatpush1.msra.mxu0 0.0
    %715 = vmatprep.subr.mxu0 0.0
    %716 = vmatpush1.msra.mxu0 0.0
    %717 = vmatprep.subr.mxu0 0.0
    %718 = vmatpush1.msra.mxu0 0.0
    %719 = vmatprep.subr.mxu0 0.0
    %720 = vmatpush1.msra.mxu0 0.0
    %721 = vmatprep.subr.mxu0 0.0
    %722 = vmatpush1.msra.mxu0 0.0
    %723 = vmatprep.subr.mxu0 0.0
    %724 = vmatpush1.msra.mxu0 0.0
    %725 = vmatprep.subr.mxu0 0.0
    %726 = vmatpush1.msra.mxu0 0.0
    %727 = vmatprep.subr.mxu0 0.0
    %728 = vmatpush1.msra.mxu0 0.0
    %729 = vmatprep.subr.mxu0 0.0
    %730 = vmatpush1.msra.mxu0 0.0
    %731 = vmatprep.subr.mxu0 0.0
    %732 = vmatpush1.msra.mxu0 0.0
    %733 = vmatprep.subr.mxu0 0.0
    %734 = vmatpush1.msra.mxu0 0.0
    %735 = vmatprep.subr.mxu0 0.0
    %736 = vmatpush1.msra.mxu0 0.0
    %737 = vmatprep.subr.mxu0 0.0
    %738 = vmatpush1.msra.mxu0 0.0
    %739 = vmatprep.mubr.f32.mxu0 0.0
    %740 = vmatmul.mubr.f32.gmra.mrb[0].mxu0 %v673
    %v741 = vpop.f32.mrb[0].mxu0
    %v742 = vadd.f32 0.0, %v741
    %v743 = vpop.f32.mrb[0].mxu0
    %744 = vdwg.mxu0
    %s745 = scalar_lea.vmem [#allocation4], 40
    %v746 = vld [vmem:[%s745] sm:$0xff]
    %v747 = vadd.f32 %v746, %v340
    %v748 = vadd.f32 %v747, %v742
    %v749 = vxor.u32 %v748, 2147483648
    %v750 = vmul.f32 %v749, 1.442695
    %v751 = vpow.pop %v750
    %v752 = vadd.f32 %v751, 1.0
    %v753 = vrcp.pop %v752
    %v754 = vmul.f32 1.0, %v753
    %755 = vst [vmem:[%s745] sm:$0xff] %v754
    %756 = vmatprep.subr.mxu0 0.0
    %757 = vmatpush1.msra.mxu0 %v247
    %758 = vmatprep.subr.mxu0 0.0
    %759 = vmatpush1.msra.mxu0 %v248
    %760 = vmatprep.subr.mxu0 0.0
    %761 = vmatpush1.msra.mxu0 %v249
    %762 = vmatprep.subr.mxu0 0.0
    %763 = vmatpush1.msra.mxu0 %v250
    %764 = vmatprep.subr.mxu0 0.0
    %765 = vmatpush1.msra.mxu0 %v251
    %766 = vmatprep.subr.mxu0 0.0
    %767 = vmatpush1.msra.mxu0 %v252
    %768 = vmatprep.subr.mxu0 0.0
    %769 = vmatpush1.msra.mxu0 %v253
    %770 = vmatprep.subr.mxu0 0.0
    %771 = vmatpush1.msra.mxu0 %v254
    %772 = vmatprep.subr.mxu0 0.0
    %773 = vmatpush1.msra.mxu0 %v255
    %774 = vmatprep.subr.mxu0 0.0
    %775 = vmatpush1.msra.mxu0 %v256
    %776 = vmatprep.subr.mxu0 0.0
    %777 = vmatpush1.msra.mxu0 %v257
    %778 = vmatprep.subr.mxu0 0.0
    %779 = vmatpush1.msra.mxu0 %v258
    %780 = vmatprep.subr.mxu0 0.0
    %781 = vmatpush1.msra.mxu0 %v259
    %782 = vmatprep.subr.mxu0 0.0
    %783 = vmatpush1.msra.mxu0 %v260
    %784 = vmatprep.subr.mxu0 0.0
    %785 = vmatpush1.msra.mxu0 %v261
    %786 = vmatprep.subr.mxu0 0.0
    %787 = vmatpush1.msra.mxu0 %v262
    %788 = vmatprep.subr.mxu0 0.0
    %789 = vmatpush1.msra.mxu0 0.0
    %790 = vmatprep.subr.mxu0 0.0
    %791 = vmatpush1.msra.mxu0 0.0
    %792 = vmatprep.subr.mxu0 0.0
    %793 = vmatpush1.msra.mxu0 0.0
    %794 = vmatprep.subr.mxu0 0.0
    %795 = vmatpush1.msra.mxu0 0.0
    %796 = vmatprep.subr.mxu0 0.0
    %797 = vmatpush1.msra.mxu0 0.0
    %798 = vmatprep.subr.mxu0 0.0
    %799 = vmatpush1.msra.mxu0 0.0
    %800 = vmatprep.subr.mxu0 0.0
    %801 = vmatpush1.msra.mxu0 0.0
    %802 = vmatprep.subr.mxu0 0.0
    %803 = vmatpush1.msra.mxu0 0.0
    %804 = vmatprep.subr.mxu0 0.0
    %805 = vmatpush1.msra.mxu0 0.0
    %806 = vmatprep.subr.mxu0 0.0
    %807 = vmatpush1.msra.mxu0 0.0
    %808 = vmatprep.subr.mxu0 0.0
    %809 = vmatpush1.msra.mxu0 0.0
    %810 = vmatprep.subr.mxu0 0.0
    %811 = vmatpush1.msra.mxu0 0.0
    %812 = vmatprep.subr.mxu0 0.0
    %813 = vmatpush1.msra.mxu0 0.0
    %814 = vmatprep.subr.mxu0 0.0
    %815 = vmatpush1.msra.mxu0 0.0
    %816 = vmatprep.subr.mxu0 0.0
    %817 = vmatpush1.msra.mxu0 0.0
    %818 = vmatprep.subr.mxu0 0.0
    %819 = vmatpush1.msra.mxu0 0.0
    %820 = vmatprep.mubr.f32.mxu0 0.0
    %821 = vmatmul.mubr.f32.gmra.mrb[0].mxu0 %v754
    %v822 = vpop.f32.mrb[0].mxu0
    %v823 = vadd.f32 0.0, %v822
    %v824 = vpop.f32.mrb[0].mxu0
    %825 = vdwg.mxu0
    %s826 = scalar_lea.vmem [#allocation4], 48
    %v827 = vld [vmem:[%s826] sm:$0xff]
    %v828 = vadd.f32 %v827, %v340
    %v829 = vadd.f32 %v828, %v823
    %v830 = vxor.u32 %v829, 2147483648
    %v831 = vmul.f32 %v830, 1.442695
    %v832 = vpow.pop %v831
    %v833 = vadd.f32 %v832, 1.0
    %v834 = vrcp.pop %v833
    %v835 = vmul.f32 1.0, %v834
    %836 = vst [vmem:[%s826] sm:$0xff] %v835
    %837 = vmatprep.subr.mxu0 0.0
    %838 = vmatpush1.msra.mxu0 %v247
    %839 = vmatprep.subr.mxu0 0.0
    %840 = vmatpush1.msra.mxu0 %v248
    %841 = vmatprep.subr.mxu0 0.0
    %842 = vmatpush1.msra.mxu0 %v249
    %843 = vmatprep.subr.mxu0 0.0
    %844 = vmatpush1.msra.mxu0 %v250
    %845 = vmatprep.subr.mxu0 0.0
    %846 = vmatpush1.msra.mxu0 %v251
    %847 = vmatprep.subr.mxu0 0.0
    %848 = vmatpush1.msra.mxu0 %v252
    %849 = vmatprep.subr.mxu0 0.0
    %850 = vmatpush1.msra.mxu0 %v253
    %851 = vmatprep.subr.mxu0 0.0
    %852 = vmatpush1.msra.mxu0 %v254
    %853 = vmatprep.subr.mxu0 0.0
    %854 = vmatpush1.msra.mxu0 %v255
    %855 = vmatprep.subr.mxu0 0.0
    %856 = vmatpush1.msra.mxu0 %v256
    %857 = vmatprep.subr.mxu0 0.0
    %858 = vmatpush1.msra.mxu0 %v257
    %859 = vmatprep.subr.mxu0 0.0
    %860 = vmatpush1.msra.mxu0 %v258
    %861 = vmatprep.subr.mxu0 0.0
    %862 = vmatpush1.msra.mxu0 %v259
    %863 = vmatprep.subr.mxu0 0.0
    %864 = vmatpush1.msra.mxu0 %v260
    %865 = vmatprep.subr.mxu0 0.0
    %866 = vmatpush1.msra.mxu0 %v261
    %867 = vmatprep.subr.mxu0 0.0
    %868 = vmatpush1.msra.mxu0 %v262
    %869 = vmatprep.subr.mxu0 0.0
    %870 = vmatpush1.msra.mxu0 0.0
    %871 = vmatprep.subr.mxu0 0.0
    %872 = vmatpush1.msra.mxu0 0.0
    %873 = vmatprep.subr.mxu0 0.0
    %874 = vmatpush1.msra.mxu0 0.0
    %875 = vmatprep.subr.mxu0 0.0
    %876 = vmatpush1.msra.mxu0 0.0
    %877 = vmatprep.subr.mxu0 0.0
    %878 = vmatpush1.msra.mxu0 0.0
    %879 = vmatprep.subr.mxu0 0.0
    %880 = vmatpush1.msra.mxu0 0.0
    %881 = vmatprep.subr.mxu0 0.0
    %882 = vmatpush1.msra.mxu0 0.0
    %883 = vmatprep.subr.mxu0 0.0
    %884 = vmatpush1.msra.mxu0 0.0
    %885 = vmatprep.subr.mxu0 0.0
    %886 = vmatpush1.msra.mxu0 0.0
    %887 = vmatprep.subr.mxu0 0.0
    %888 = vmatpush1.msra.mxu0 0.0
    %889 = vmatprep.subr.mxu0 0.0
    %890 = vmatpush1.msra.mxu0 0.0
    %891 = vmatprep.subr.mxu0 0.0
    %892 = vmatpush1.msra.mxu0 0.0
    %893 = vmatprep.subr.mxu0 0.0
    %894 = vmatpush1.msra.mxu0 0.0
    %895 = vmatprep.subr.mxu0 0.0
    %896 = vmatpush1.msra.mxu0 0.0
    %897 = vmatprep.subr.mxu0 0.0
    %898 = vmatpush1.msra.mxu0 0.0
    %899 = vmatprep.subr.mxu0 0.0
    %900 = vmatpush1.msra.mxu0 0.0
    %901 = vmatprep.mubr.f32.mxu0 0.0
    %902 = vmatmul.mubr.f32.gmra.mrb[0].mxu0 %v835
    %v903 = vpop.f32.mrb[0].mxu0
    %v904 = vadd.f32 0.0, %v903
    %v905 = vpop.f32.mrb[0].mxu0
    %906 = vdwg.mxu0
    %s907 = scalar_lea.vmem [#allocation4], 56
    %v908 = vld [vmem:[%s907] sm:$0xff]
    %v909 = vadd.f32 %v908, %v340
    %v910 = vadd.f32 %v909, %v904
    %v911 = vxor.u32 %v910, 2147483648
    %v912 = vmul.f32 %v911, 1.442695
    %v913 = vpow.pop %v912
    %v914 = vadd.f32 %v913, 1.0
    %v915 = vrcp.pop %v914
    %v916 = vmul.f32 1.0, %v915
    %917 = vst [vmem:[%s907] sm:$0xff] %v916
    %918 = vst [vmem:[#allocation2] sm:$0xff] %v916
    %v919 = vld [vmem:[#allocation11] sm:$0xff]
    %v920 = vld [vmem:[#allocation11 + $0x8] sm:$0xff]
    %v921 = vld [vmem:[#allocation11 + $0x10] sm:$0xff]
    %v922 = vld [vmem:[#allocation11 + $0x18] sm:$0xff]
    %v923 = vld [vmem:[#allocation11 + $0x20] sm:$0xff]
    %v924 = vld [vmem:[#allocation11 + $0x28] sm:$0xff]
    %v925 = vld [vmem:[#allocation11 + $0x30] sm:$0xff]
    %v926 = vld [vmem:[#allocation11 + $0x38] sm:$0xff]
    %v927 = vld [vmem:[#allocation11 + $0x40] sm:$0xff]
    %v928 = vld [vmem:[#allocation11 + $0x48] sm:$0xff]
    %v929 = vld [vmem:[#allocation11 + $0x50] sm:$0xff]
    %v930 = vld [vmem:[#allocation11 + $0x58] sm:$0xff]
    %v931 = vld [vmem:[#allocation11 + $0x60] sm:$0xff]
    %v932 = vld [vmem:[#allocation11 + $0x68] sm:$0xff]
    %v933 = vld [vmem:[#allocation11 + $0x70] sm:$0xff]
    %v934 = vld [vmem:[#allocation11 + $0x78] sm:$0xff]
    %v935 = vld [vmem:[%s5] sm:$0x1]
    %v936 = vld [vmem:[#allocation3] sm:$0xff]
    %v937 = vld [vmem:[%s238] sm:$0xff]
    %v938 = vld [vmem:[%s238 + $0x8] sm:$0xff]
    %v939 = vld [vmem:[%s238 + $0x10] sm:$0xff]
    %v940 = vld [vmem:[%s238 + $0x18] sm:$0xff]
    %v941 = vld [vmem:[%s238 + $0x20] sm:$0xff]
    %v942 = vld [vmem:[%s238 + $0x28] sm:$0xff]
    %v943 = vld [vmem:[%s238 + $0x30] sm:$0xff]
    %v944 = vld [vmem:[%s238 + $0x38] sm:$0xff]
    %v946 = vlaneseq
    %v947 = vshrl.u32 %v946, 7
    %v948 = vsub.s32 0, %v947
    %v949 = vrot.slane %v935, %v948
    %951 = vmatprep.subr.mxu0 0.0
    %952 = vmatpush1.msra.mxu0 %v919
    %953 = vmatprep.subr.mxu0 0.0
    %954 = vmatpush1.msra.mxu0 %v920
    %955 = vmatprep.subr.mxu0 0.0
    %956 = vmatpush1.msra.mxu0 %v921
    %957 = vmatprep.subr.mxu0 0.0
    %958 = vmatpush1.msra.mxu0 %v922
    %959 = vmatprep.subr.mxu0 0.0
    %960 = vmatpush1.msra.mxu0 %v923
    %961 = vmatprep.subr.mxu0 0.0
    %962 = vmatpush1.msra.mxu0 %v924
    %963 = vmatprep.subr.mxu0 0.0
    %964 = vmatpush1.msra.mxu0 %v925
    %965 = vmatprep.subr.mxu0 0.0
    %966 = vmatpush1.msra.mxu0 %v926
    %967 = vmatprep.subr.mxu0 0.0
    %968 = vmatpush1.msra.mxu0 %v927
    %969 = vmatprep.subr.mxu0 0.0
    %970 = vmatpush1.msra.mxu0 %v928
    %971 = vmatprep.subr.mxu0 0.0
    %972 = vmatpush1.msra.mxu0 %v929
    %973 = vmatprep.subr.mxu0 0.0
    %974 = vmatpush1.msra.mxu0 %v930
    %975 = vmatprep.subr.mxu0 0.0
    %976 = vmatpush1.msra.mxu0 %v931
    %977 = vmatprep.subr.mxu0 0.0
    %978 = vmatpush1.msra.mxu0 %v932
    %979 = vmatprep.subr.mxu0 0.0
    %980 = vmatpush1.msra.mxu0 %v933
    %981 = vmatprep.subr.mxu0 0.0
    %982 = vmatpush1.msra.mxu0 %v934
    %983 = vmatprep.subr.mxu0 0.0
    %984 = vmatpush1.msra.mxu0 0.0
    %985 = vmatprep.subr.mxu0 0.0
    %986 = vmatpush1.msra.mxu0 0.0
    %987 = vmatprep.subr.mxu0 0.0
    %988 = vmatpush1.msra.mxu0 0.0
    %989 = vmatprep.subr.mxu0 0.0
    %990 = vmatpush1.msra.mxu0 0.0
    %991 = vmatprep.subr.mxu0 0.0
    %992 = vmatpush1.msra.mxu0 0.0
    %993 = vmatprep.subr.mxu0 0.0
    %994 = vmatpush1.msra.mxu0 0.0
    %995 = vmatprep.subr.mxu0 0.0
    %996 = vmatpush1.msra.mxu0 0.0
    %997 = vmatprep.subr.mxu0 0.0
    %998 = vmatpush1.msra.mxu0 0.0
    %999 = vmatprep.subr.mxu0 0.0
    %1000 = vmatpush1.msra.mxu0 0.0
    %1001 = vmatprep.subr.mxu0 0.0
    %1002 = vmatpush1.msra.mxu0 0.0
    %1003 = vmatprep.subr.mxu0 0.0
    %1004 = vmatpush1.msra.mxu0 0.0
    %1005 = vmatprep.subr.mxu0 0.0
    %1006 = vmatpush1.msra.mxu0 0.0
    %1007 = vmatprep.subr.mxu0 0.0
    %1008 = vmatpush1.msra.mxu0 0.0
    %1009 = vmatprep.subr.mxu0 0.0
    %1010 = vmatpush1.msra.mxu0 0.0
    %1011 = vmatprep.subr.mxu0 0.0
    %1012 = vmatpush1.msra.mxu0 0.0
    %1013 = vmatprep.subr.mxu0 0.0
    %1014 = vmatpush1.msra.mxu0 0.0
    %1015 = vmatprep.mubr.f32.mxu0 0.0
    %1016 = vmatmul.mubr.f32.gmra.mrb[0].mxu0 %v937
    %v1017 = vpop.f32.mrb[0].mxu0
    %v1018 = vadd.f32 %v949, %v1017
    %v1019 = vpop.f32.mrb[0].mxu0
    %1020 = vmatprep.mubr.f32.mxu0 0.0
    %1021 = vmatmul.mubr.f32.gmra.mrb[0].mxu0 %v938
    %v1022 = vpop.f32.mrb[0].mxu0
    %v1023 = vadd.f32 %v949, %v1022
    %v1024 = vpop.f32.mrb[0].mxu0
    %1025 = vmatprep.mubr.f32.mxu0 0.0
    %1026 = vmatmul.mubr.f32.gmra.mrb[0].mxu0 %v939
    %v1027 = vpop.f32.mrb[0].mxu0
    %v1028 = vadd.f32 %v949, %v1027
    %v1029 = vpop.f32.mrb[0].mxu0
    %1030 = vmatprep.mubr.f32.mxu0 0.0
    %1031 = vmatmul.mubr.f32.gmra.mrb[0].mxu0 %v940
    %v1032 = vpop.f32.mrb[0].mxu0
    %v1033 = vadd.f32 %v949, %v1032
    %v1034 = vpop.f32.mrb[0].mxu0
    %1035 = vmatprep.mubr.f32.mxu0 0.0
    %1036 = vmatmul.mubr.f32.gmra.mrb[0].mxu0 %v941
    %v1037 = vpop.f32.mrb[0].mxu0
    %v1038 = vadd.f32 %v949, %v1037
    %v1039 = vpop.f32.mrb[0].mxu0
    %1040 = vmatprep.mubr.f32.mxu0 0.0
    %1041 = vmatmul.mubr.f32.gmra.mrb[0].mxu0 %v942
    %v1042 = vpop.f32.mrb[0].mxu0
    %v1043 = vadd.f32 %v949, %v1042
    %v1044 = vpop.f32.mrb[0].mxu0
    %1045 = vmatprep.mubr.f32.mxu0 0.0
    %1046 = vmatmul.mubr.f32.gmra.mrb[0].mxu0 %v943
    %v1047 = vpop.f32.mrb[0].mxu0
    %v1048 = vadd.f32 %v949, %v1047
    %v1049 = vpop.f32.mrb[0].mxu0
    %1050 = vmatprep.mubr.f32.mxu0 0.0
    %1051 = vmatmul.mubr.f32.gmra.mrb[0].mxu0 %v944
    %v1052 = vpop.f32.mrb[0].mxu0
    %v1053 = vadd.f32 %v949, %v1052
    %v1054 = vpop.f32.mrb[0].mxu0
    %1055 = vdwg.mxu0
    %v1056 = vmax.f32 %v1018, 0.0
    %v1057 = vmax.f32 %v1023, 0.0
    %v1058 = vmax.f32 %v1028, 0.0
    %v1059 = vmax.f32 %v1033, 0.0
    %v1060 = vmax.f32 %v1038, 0.0
    %v1061 = vmax.f32 %v1043, 0.0
    %v1062 = vmax.f32 %v1048, 0.0
    %v1063 = vmax.f32 %v1053, 0.0
    %v1064 = vmax.f32 %v1056, %v1060
    %v1065 = vmax.f32 %v1057, %v1061
    %v1066 = vmax.f32 %v1058, %v1062
    %v1067 = vmax.f32 %v1059, %v1063
    %v1068 = vmax.f32 %v1064, %v1065
    %v1069 = vmax.f32 %v1066, %v1067
    %v1070 = vmax.f32 %v1068, %v1069
    %v1071 = vmax.f32 %v936, %v1070
    %1072 = vst [vmem:[#allocation3] sm:$0xff] %v1071
    // Predicated region
    $region58: #{tpu_custom_call.1} parent=1 // pred_check
      %p1073 = pneg %p101
    $region59: #{tpu_custom_call.1} parent=1 // pred_check_branch
      %1075 = sbr.rel (%p1073) target = $region61
    $region60: #{tpu_custom_call.1} parent=1 // pred_region
      %v1076 = vld [vmem:[#allocation3] sm:$0xff]
      %v1077 = vld [vmem:[#allocation13] sm:$0xff]
      %v1078 = vld [vmem:[#allocation13 + $0x8] sm:$0xff]
      %v1079 = vld [vmem:[#allocation13 + $0x10] sm:$0xff]
      %v1080 = vld [vmem:[#allocation13 + $0x18] sm:$0xff]
      %v1081 = vld [vmem:[#allocation13 + $0x20] sm:$0xff]
      %v1082 = vld [vmem:[#allocation13 + $0x28] sm:$0xff]
      %v1083 = vld [vmem:[#allocation13 + $0x30] sm:$0xff]
      %v1084 = vld [vmem:[#allocation13 + $0x38] sm:$0xff]
      %v1085 = vld [vmem:[#allocation13 + $0x40] sm:$0xff]
      %v1086 = vld [vmem:[#allocation13 + $0x48] sm:$0xff]
      %v1087 = vld [vmem:[#allocation13 + $0x50] sm:$0xff]
      %v1088 = vld [vmem:[#allocation13 + $0x58] sm:$0xff]
      %v1089 = vld [vmem:[#allocation13 + $0x60] sm:$0xff]
      %v1090 = vld [vmem:[#allocation13 + $0x68] sm:$0xff]
      %v1091 = vld [vmem:[#allocation13 + $0x70] sm:$0xff]
      %v1092 = vld [vmem:[#allocation13 + $0x78] sm:$0xff]
      %v1093 = vld [vmem:[%s7] sm:$0x1]
      %v1095 = vlaneseq
      %v1096 = vshrl.u32 %v1095, 7
      %v1097 = vsub.s32 0, %v1096
      %v1098 = vrot.slane %v1093, %v1097
      %1100 = vmatprep.subr.mxu0 0.0
      %1101 = vmatpush1.msra.mxu0 %v1077
      %1102 = vmatprep.subr.mxu0 0.0
      %1103 = vmatpush1.msra.mxu0 %v1078
      %1104 = vmatprep.subr.mxu0 0.0
      %1105 = vmatpush1.msra.mxu0 %v1079
      %1106 = vmatprep.subr.mxu0 0.0
      %1107 = vmatpush1.msra.mxu0 %v1080
      %1108 = vmatprep.subr.mxu0 0.0
      %1109 = vmatpush1.msra.mxu0 %v1081
      %1110 = vmatprep.subr.mxu0 0.0
      %1111 = vmatpush1.msra.mxu0 %v1082
      %1112 = vmatprep.subr.mxu0 0.0
      %1113 = vmatpush1.msra.mxu0 %v1083
      %1114 = vmatprep.subr.mxu0 0.0
      %1115 = vmatpush1.msra.mxu0 %v1084
      %1116 = vmatprep.subr.mxu0 0.0
      %1117 = vmatpush1.msra.mxu0 %v1085
      %1118 = vmatprep.subr.mxu0 0.0
      %1119 = vmatpush1.msra.mxu0 %v1086
      %1120 = vmatprep.subr.mxu0 0.0
      %1121 = vmatpush1.msra.mxu0 %v1087
      %1122 = vmatprep.subr.mxu0 0.0
      %1123 = vmatpush1.msra.mxu0 %v1088
      %1124 = vmatprep.subr.mxu0 0.0
      %1125 = vmatpush1.msra.mxu0 %v1089
      %1126 = vmatprep.subr.mxu0 0.0
      %1127 = vmatpush1.msra.mxu0 %v1090
      %1128 = vmatprep.subr.mxu0 0.0
      %1129 = vmatpush1.msra.mxu0 %v1091
      %1130 = vmatprep.subr.mxu0 0.0
      %1131 = vmatpush1.msra.mxu0 %v1092
      %1132 = vmatprep.subr.mxu0 0.0
      %1133 = vmatpush1.msra.mxu0 0.0
      %1134 = vmatprep.subr.mxu0 0.0
      %1135 = vmatpush1.msra.mxu0 0.0
      %1136 = vmatprep.subr.mxu0 0.0
      %1137 = vmatpush1.msra.mxu0 0.0
      %1138 = vmatprep.subr.mxu0 0.0
      %1139 = vmatpush1.msra.mxu0 0.0
      %1140 = vmatprep.subr.mxu0 0.0
      %1141 = vmatpush1.msra.mxu0 0.0
      %1142 = vmatprep.subr.mxu0 0.0
      %1143 = vmatpush1.msra.mxu0 0.0
      %1144 = vmatprep.subr.mxu0 0.0
      %1145 = vmatpush1.msra.mxu0 0.0
      %1146 = vmatprep.subr.mxu0 0.0
      %1147 = vmatpush1.msra.mxu0 0.0
      %1148 = vmatprep.subr.mxu0 0.0
      %1149 = vmatpush1.msra.mxu0 0.0
      %1150 = vmatprep.subr.mxu0 0.0
      %1151 = vmatpush1.msra.mxu0 0.0
      %1152 = vmatprep.subr.mxu0 0.0
      %1153 = vmatpush1.msra.mxu0 0.0
      %1154 = vmatprep.subr.mxu0 0.0
      %1155 = vmatpush1.msra.mxu0 0.0
      %1156 = vmatprep.subr.mxu0 0.0
      %1157 = vmatpush1.msra.mxu0 0.0
      %1158 = vmatprep.subr.mxu0 0.0
      %1159 = vmatpush1.msra.mxu0 0.0
      %1160 = vmatprep.subr.mxu0 0.0
      %1161 = vmatpush1.msra.mxu0 0.0
      %1162 = vmatprep.subr.mxu0 0.0
      %1163 = vmatpush1.msra.mxu0 0.0
      %1164 = vmatprep.mubr.f32.mxu0 0.0
      %1165 = vmatmul.mubr.f32.gmra.mrb[0].mxu0 %v1076
      %v1166 = vpop.f32.mrb[0].mxu0
      %v1167 = vadd.f32 %v1098, %v1166
      %v1168 = vpop.f32.mrb[0].mxu0
      %1169 = vdwg.mxu0
      %1170 = vst [vmem:[#allocation14] sm:$0xff] %v1167
      %v1171 = vld [vmem:[#allocation2] sm:$0xff]
      %1172 = vst [vmem:[#allocation15] sm:$0xff] %v1171
    $region61: #{tpu_custom_call.1} parent=1 // pred_fallthru
      _
    // Predicated region
    $region62: #{tpu_custom_call.1} parent=1 // pred_check
      _
    $region63: #{tpu_custom_call.1} parent=1 // pred_check_branch
      %1174 = sbr.rel (0) target = $region65
    $region64: #{tpu_custom_call.1} parent=1 // pred_region
      %s1176 = ssub.s32 128, 128
      %1177 = vsyncadd [#allocation7], %s1176
      %s1179 = sshll.u32 [#allocation14], 4
      %s1180 = int_to_ptr.vmem [resolvable:$true] %s1179
      %1182 = dma.vmem_to_hbm [thread:$0]  %s1180, 128, %s8, [#allocation7]
    $region65: #{tpu_custom_call.1} parent=1 // pred_fallthru
      _
    // Predicated region
    $region66: #{tpu_custom_call.1} parent=1 // pred_check
      _
    $region67: #{tpu_custom_call.1} parent=1 // pred_check_branch
      %1184 = sbr.rel (0) target = $region69
    $region68: #{tpu_custom_call.1} parent=1 // pred_region
      %s1186 = ssub.s32 128, 128
      %1187 = vsyncadd [#allocation16], %s1186
      %s1189 = sshll.u32 [#allocation15], 4
      %s1190 = int_to_ptr.vmem [resolvable:$true] %s1189
      %1192 = dma.vmem_to_hbm [thread:$0]  %s1190, 128, %s9, [#allocation16]
    $region69: #{tpu_custom_call.1} parent=1 // pred_fallthru
      _
    // Predicated region
    $region70: #{tpu_custom_call.1} parent=1 // pred_check
      _
    $region71: #{tpu_custom_call.1} parent=1 // pred_check_branch
      %1194 = sbr.rel (0) target = $region73
    $region72: #{tpu_custom_call.1} parent=1 // pred_region
      %1195 = dma.done [#allocation7], 128
    $region73: #{tpu_custom_call.1} parent=1 // pred_fallthru
      _
    // Predicated region
    $region74: #{tpu_custom_call.1} parent=1 // pred_check
      _
    $region75: #{tpu_custom_call.1} parent=1 // pred_check_branch
      %1197 = sbr.rel (0) target = $region77
    $region76: #{tpu_custom_call.1} parent=1 // pred_region
      %1198 = dma.done [#allocation16], 128
    $region77: #{tpu_custom_call.1} parent=1 // pred_fallthru
      _
    %1199 = vsyncpa [#allocation6], 1
    %1200 = vsyncpa [#allocation9], 1
    %1201 = vsyncpa [#allocation12], 1
    %1202 = vsyncpa [#allocation7], 1
    %1203 = vsyncpa [#allocation16], 1

</llo_original>
